<compile_context>
chip_gen: v5e
topology: v5e:2x2
jax: 0.10.0
libtpu: 0.0.40
codegen_flags: <defaults>
</compile_context>

<pallas_src>
import math

import jax
import jax.numpy as jnp
from jax.experimental import pallas as pl
from jax.experimental.pallas import tpu as pltpu


# ----------------------------- model hyper-params -----------------------------
B = 2          # batch
S = 8          # sequence length
D = 32         # d_model
H = 4          # num heads
DH = D // H    # head dim
F = 64         # ffn hidden dim
N = B * H      # batched (batch, head) pairs
LN_EPS = 1e-5


def _layernorm(x, gamma, beta):
    mu = jnp.mean(x, axis=-1, keepdims=True)
    xc = x - mu
    var = jnp.mean(xc * xc, axis=-1, keepdims=True)
    return xc * jax.lax.rsqrt(var + LN_EPS) * gamma + beta


def encoder_block_kernel(x_ref, mask_ref, wh_ref, bqkv_ref, wffn_ref, vec_ref,
                         out_ref):
    # ---- unpack the small-vector slab (rows: bo, g1, be1, b1, b2, g2, be2) ----
    bo  = vec_ref[0:1, 0:D]
    g1  = vec_ref[1:2, 0:D]
    be1 = vec_ref[2:3, 0:D]
    b1  = vec_ref[3:4, :]
    b2  = vec_ref[4:5, 0:D]
    g2  = vec_ref[5:6, 0:D]
    be2 = vec_ref[6:7, 0:D]

    x = x_ref[...]                                                  # (B*S, D)

    # ---- replicate activations over heads: (N, S, D), n = b*H + h ----
    x3 = x.reshape(B, S, D)
    xx = jnp.broadcast_to(x3[:, None, :, :], (B, H, S, D)).reshape(N, S, D)

    # ---- fused per-(batch,head) QKV projection: one batched einsum ----
    # wh_ref[n, 0:3*DH, :] = [Wq_h^T ; Wk_h^T ; Wv_h^T] (rows = head output dims)
    # wh_ref[n, 3*DH:,  :] = Wo rows belonging to head h
    wqkv = wh_ref[:, 0:3 * DH, :]                                   # (N, 3*DH, D)
    qkv = jnp.einsum("nsd,ned->nse", xx, wqkv,
                     preferred_element_type=jnp.float32) + bqkv_ref[...]
    q = qkv[:, :, 0:DH]                                             # (N, S, DH)
    k = qkv[:, :, DH:2 * DH]
    v = qkv[:, :, 2 * DH:3 * DH]

    # ---- masked softmax attention, all (b, h) pairs batched ----
    bias = (mask_ref[...] - 1.0) * 1e9                              # (N, 1, S)
    s = jnp.einsum("nqe,nke->nqk", q, k,
                   preferred_element_type=jnp.float32) * (1.0 / math.sqrt(DH))
    s = s + bias
    s = s - jnp.max(s, axis=-1, keepdims=True)
    e = jnp.exp(s)
    p = e / jnp.sum(e, axis=-1, keepdims=True)                      # exact divide
    o = jnp.einsum("nqk,nke->nqe", p, v,
                   preferred_element_type=jnp.float32)              # (N, S, DH)

    # ---- output projection: per-head Wo rows, then sum over heads ----
    wo_h = wh_ref[:, 3 * DH:4 * DH, :]                              # (N, DH, D)
    proj = jnp.einsum("nse,ned->nsd", o, wo_h,
                      preferred_element_type=jnp.float32)           # (N, S, D)
    proj = proj.reshape(B, H, S, D)
    attn = proj[:, 0]
    for h in range(1, H):                                           # tiny static sum
        attn = attn + proj[:, h]
    attn = attn.reshape(B * S, D) + bo

    # ---- residual + LayerNorm #1 ----
    y1 = _layernorm(attn + x, g1, be1)

    # ---- feed-forward ----
    w1 = wffn_ref[0:D, :]                                           # (D, F)
    w2 = wffn_ref[D:D + F, 0:D]                                     # (F, D)
    hdn = jnp.dot(y1, w1, preferred_element_type=jnp.float32) + b1
    hdn = jnp.maximum(hdn, 0.0)
    ffn = jnp.dot(hdn, w2, preferred_element_type=jnp.float32) + b2

    # ---- residual + LayerNorm #2 ----
    y2 = _layernorm(ffn + y1, g2, be2)
    out_ref[...] = y2.astype(out_ref.dtype)


@jax.jit
def encoder_block(x, attention_mask, packed):
    """x: [B, S, D] f32; attention_mask: [B, 1, S] f32 (1=keep, 0=mask)."""
    w_heads, b_qkv, w_ffn, vecs = packed

    x_flat = x.reshape(B * S, D)
    mask_bh = jnp.broadcast_to(attention_mask.reshape(B, 1, 1, S),
                               (B, H, 1, S)).reshape(N, 1, S)

    flops = (2 * N * S * (3 * DH) * D        # fused QKV (batched)
             + 2 * N * S * S * DH * 2        # scores + PV
             + 2 * N * S * DH * D            # per-head output projection
             + 2 * B * S * D * F             # FFN up
             + 2 * B * S * F * D)            # FFN down
    transcendentals = N * S * S + 4 * B * S
    bytes_accessed = 4 * (2 * B * S * D + N * S + N * 4 * DH * D
                          + N * 3 * DH + (D + F) * F + 8 * F)

    out_flat = pl.pallas_call(
        encoder_block_kernel,
        out_shape=jax.ShapeDtypeStruct((B * S, D), jnp.float32),
        # single step: no grid / pipeline — whole arrays live in VMEM
        in_specs=[pl.BlockSpec(memory_space=pltpu.MemorySpace.VMEM)] * 6,
        out_specs=pl.BlockSpec(memory_space=pltpu.MemorySpace.VMEM),
        cost_estimate=pl.CostEstimate(flops=flops,
                                      transcendentals=transcendentals,
                                      bytes_accessed=bytes_accessed),
    )(x_flat, mask_bh, w_heads, b_qkv, w_ffn, vecs)

    # module returns (normalized_result_2, attention_mask)
    return out_flat.reshape(B, S, D), attention_mask


# ----------------------------- parameter packing -----------------------------
def pack_params(params):
    """Pack the 16 natural parameters into 4 lane-friendly slabs (done once)."""
    (wq, bq, wk, bk, wv, bv, wo, bo, g1, be1, w1, b1, w2, b2, g2, be2) = params

    def head_T(w):  # (D, D) -> (H, DH, D): block h = W[:, h*DH:(h+1)*DH]^T
        return jnp.stack([w[:, h * DH:(h + 1) * DH].T for h in range(H)], axis=0)

    wqT, wkT, wvT = head_T(wq), head_T(wk), head_T(wv)
    woH = jnp.stack([wo[h * DH:(h + 1) * DH, :] for h in range(H)], axis=0)
    per_head = jnp.concatenate([wqT, wkT, wvT, woH], axis=1)        # (H, 4*DH, D)
    w_heads = jnp.tile(per_head, (B, 1, 1))                         # (N, 4*DH, D)

    def head_bias(bvec):  # (1, D) -> (H, 1, DH)
        return jnp.stack([bvec[:, h * DH:(h + 1) * DH] for h in range(H)], axis=0)

    b_qkv = jnp.concatenate([head_bias(bq), head_bias(bk), head_bias(bv)], axis=2)
    b_qkv = jnp.tile(b_qkv, (B, 1, 1))                              # (N, 1, 3*DH)

    w2_pad = jnp.concatenate([w2, jnp.zeros((F, F - D), jnp.float32)], axis=1)
    w_ffn = jnp.concatenate([w1, w2_pad], axis=0)                   # (D+F, F)

    def pad_row(vec):  # (1, n) -> (1, F)
        if vec.shape[1] < F:
            return jnp.concatenate(
                [vec, jnp.zeros((1, F - vec.shape[1]), jnp.float32)], axis=1)
        return vec

    vecs = jnp.concatenate([pad_row(bo), pad_row(g1), pad_row(be1), b1,
                            pad_row(b2), pad_row(g2), pad_row(be2),
                            jnp.zeros((1, F), jnp.float32)], axis=0)  # (8, F)

    return w_heads, b_qkv, w_ffn, vecs


def init_params(key):
    ks = jax.random.split(key, 8)

    def lin(k, fan_in, shape):
        return jax.random.normal(k, shape, jnp.float32) / math.sqrt(fan_in)

    wq = lin(ks[0], D, (D, D)); bq = jnp.zeros((1, D), jnp.float32)
    wk = lin(ks[1], D, (D, D)); bk = jnp.zeros((1, D), jnp.float32)
    wv = lin(ks[2], D, (D, D)); bv = jnp.zeros((1, D), jnp.float32)
    wo = lin(ks[3], D, (D, D)); bo = jnp.zeros((1, D), jnp.float32)
    g1 = jnp.ones((1, D), jnp.float32); be1 = jnp.zeros((1, D), jnp.float32)
    w1 = lin(ks[4], D, (D, F)); b1 = jnp.zeros((1, F), jnp.float32)
    w2 = lin(ks[5], F, (F, D)); b2 = jnp.zeros((1, D), jnp.float32)
    g2 = jnp.ones((1, D), jnp.float32); be2 = jnp.zeros((1, D), jnp.float32)
    return (wq, bq, wk, bk, wv, bv, wo, bo, g1, be1, w1, b1, w2, b2, g2, be2)


# ----------------------------- pure-JAX reference -----------------------------
def encoder_block_ref(x, attention_mask, params):
    (wq, bq, wk, bk, wv, bv, wo, bo, g1, be1, w1, b1, w2, b2, g2, be2) = params
    xf = x.reshape(B * S, D)
    q = xf @ wq + bq
    k = xf @ wk + bk
    v = xf @ wv + bv
    bias = (attention_mask.reshape(B, S) - 1.0) * 1e9

    rows = []
    for b in range(B):
        rs = slice(b * S, (b + 1) * S)
        heads = []
        for h in range(H):
            cs = slice(h * DH, (h + 1) * DH)
            sc = q[rs, cs] @ k[rs, cs].T / math.sqrt(DH) + bias[b][None, :]
            p = jax.nn.softmax(sc, axis=-1)
            heads.append(p @ v[rs, cs])
        rows.append(jnp.concatenate(heads, axis=-1))
    attn = jnp.concatenate(rows, axis=0) @ wo + bo

    def ln(t, g, be):
        mu = t.mean(-1, keepdims=True)
        var = ((t - mu) ** 2).mean(-1, keepdims=True)
        return (t - mu) / jnp.sqrt(var + LN_EPS) * g + be

    y1 = ln(attn + xf, g1, be1)
    hid = jnp.maximum(y1 @ w1 + b1, 0.0)
    ffn = hid @ w2 + b2
    y2 = ln(ffn + y1, g2, be2)
    return y2.reshape(B, S, D)


if __name__ == "__main__":
    key = jax.random.PRNGKey(0)
    k_x, k_p = jax.random.split(key)

    x = jax.random.normal(k_x, (B, S, D), jnp.float32)
    # key-padding style mask: mask out the last 2 positions of batch element 1
    mask = jnp.ones((B, 1, S), jnp.float32)
    mask = mask.at[1, 0, -2:].set(0.0)

    params = init_params(k_p)
    packed = pack_params(params)          # one-time packing, outside the hot path

    out, mask_out = encoder_block(x, mask, packed)
    jax.block_until_ready(out)
    jax.block_until_ready(mask_out)

    ref = encoder_block_ref(x, mask, params)
    assert out.shape == (B, S, D) and mask_out.shape == (B, 1, S)
    assert bool(jnp.all(jnp.isfinite(out)))
    # loose tolerance: MXU pass decomposition / reduction order differ from XLA eager
    assert bool(jnp.allclose(out, ref, atol=5e-2, rtol=5e-2))
    print("KERNEL_OK")
</pallas_src>

<mosaic_0001>
module attributes {stable_mosaic.version = 11 : i64} {
  func.func @encoder_block_kernel(%arg0: memref<16x32xf32, #tpu.memory_space<vmem>>, %arg1: memref<8x1x8xf32, #tpu.memory_space<vmem>>, %arg2: memref<8x32x32xf32, #tpu.memory_space<vmem>>, %arg3: memref<8x1x24xf32, #tpu.memory_space<vmem>>, %arg4: memref<96x64xf32, #tpu.memory_space<vmem>>, %arg5: memref<8x64xf32, #tpu.memory_space<vmem>>, %arg6: memref<16x32xf32, #tpu.memory_space<vmem>>) attributes {dimension_semantics = [], scalar_prefetch = 0 : i64, scratch_operands = 0 : i64, tpu.core_type = #tpu.core_type<tc>} {
    %c0 = arith.constant 0 : index
    %c0_0 = arith.constant 0 : index
    %0 = vector.load %arg5[%c0, %c0_0] : memref<8x64xf32, #tpu.memory_space<vmem>>, vector<1x32xf32>
    %c1 = arith.constant 1 : index
    %c0_1 = arith.constant 0 : index
    %1 = vector.load %arg5[%c1, %c0_1] : memref<8x64xf32, #tpu.memory_space<vmem>>, vector<1x32xf32>
    %c2 = arith.constant 2 : index
    %c0_2 = arith.constant 0 : index
    %2 = vector.load %arg5[%c2, %c0_2] : memref<8x64xf32, #tpu.memory_space<vmem>>, vector<1x32xf32>
    %c3 = arith.constant 3 : index
    %c0_3 = arith.constant 0 : index
    %3 = vector.load %arg5[%c3, %c0_3] : memref<8x64xf32, #tpu.memory_space<vmem>>, vector<1x64xf32>
    %c4 = arith.constant 4 : index
    %c0_4 = arith.constant 0 : index
    %4 = vector.load %arg5[%c4, %c0_4] : memref<8x64xf32, #tpu.memory_space<vmem>>, vector<1x32xf32>
    %c5 = arith.constant 5 : index
    %c0_5 = arith.constant 0 : index
    %5 = vector.load %arg5[%c5, %c0_5] : memref<8x64xf32, #tpu.memory_space<vmem>>, vector<1x32xf32>
    %c6 = arith.constant 6 : index
    %c0_6 = arith.constant 0 : index
    %6 = vector.load %arg5[%c6, %c0_6] : memref<8x64xf32, #tpu.memory_space<vmem>>, vector<1x32xf32>
    %c0_7 = arith.constant 0 : index
    %c0_8 = arith.constant 0 : index
    %7 = vector.load %arg0[%c0_7, %c0_8] : memref<16x32xf32, #tpu.memory_space<vmem>>, vector<16x32xf32>
    %8 = vector.shape_cast %7 : vector<16x32xf32> to vector<2x8x32xf32>
    %9 = vector.shape_cast %8 : vector<2x8x32xf32> to vector<2x1x8x32xf32>
    %10 = vector.shape_cast %9 : vector<2x1x8x32xf32> to vector<2x1x8x32xf32>
    %11 = vector.broadcast %10 : vector<2x1x8x32xf32> to vector<2x4x8x32xf32>
    %12 = vector.shape_cast %11 : vector<2x4x8x32xf32> to vector<8x8x32xf32>
    %c0_9 = arith.constant 0 : index
    %c0_10 = arith.constant 0 : index
    %c0_11 = arith.constant 0 : index
    %13 = vector.load %arg2[%c0_9, %c0_10, %c0_11] : memref<8x32x32xf32, #tpu.memory_space<vmem>>, vector<8x24x32xf32>
    "tpu.trace_start"() <{level = 10 : i32, message = "nsd,ned->nse"}> : () -> ()
    %cst = arith.constant dense<0.000000e+00> : vector<8x8x24xf32>
    %14 = tpu.matmul %12, %13, %cst {dimension_numbers = #tpu.dot_dimension_numbers<[2], [2], [1], [1], [0, 0, 0, 1, 1, 1], [0], [0]>} : vector<8x8x32xf32>, vector<8x24x32xf32>, vector<8x8x24xf32> -> vector<8x8x24xf32>
    "tpu.trace_stop"() : () -> ()
    %c0_12 = arith.constant 0 : index
    %c0_13 = arith.constant 0 : index
    %c0_14 = arith.constant 0 : index
    %15 = vector.load %arg3[%c0_12, %c0_13, %c0_14] : memref<8x1x24xf32, #tpu.memory_space<vmem>>, vector<8x1x24xf32>
    %16 = vector.broadcast %15 : vector<8x1x24xf32> to vector<8x8x24xf32>
    %17 = arith.addf %14, %16 : vector<8x8x24xf32>
    %18 = vector.extract_strided_slice %17 {offsets = [0, 0, 0], sizes = [8, 8, 8], strides = [1, 1, 1]} : vector<8x8x24xf32> to vector<8x8x8xf32>
    %19 = vector.extract_strided_slice %17 {offsets = [0, 0, 8], sizes = [8, 8, 8], strides = [1, 1, 1]} : vector<8x8x24xf32> to vector<8x8x8xf32>
    %20 = vector.extract_strided_slice %17 {offsets = [0, 0, 16], sizes = [8, 8, 8], strides = [1, 1, 1]} : vector<8x8x24xf32> to vector<8x8x8xf32>
    %c0_15 = arith.constant 0 : index
    %c0_16 = arith.constant 0 : index
    %c0_17 = arith.constant 0 : index
    %21 = vector.load %arg1[%c0_15, %c0_16, %c0_17] : memref<8x1x8xf32, #tpu.memory_space<vmem>>, vector<8x1x8xf32>
    %cst_18 = arith.constant 1.000000e+00 : f32
    %22 = vector.broadcast %cst_18 : f32 to vector<8x1x8xf32>
    %23 = arith.subf %21, %22 : vector<8x1x8xf32>
    %cst_19 = arith.constant 1.000000e+09 : f32
    %24 = vector.broadcast %cst_19 : f32 to vector<8x1x8xf32>
    %25 = arith.mulf %23, %24 : vector<8x1x8xf32>
    "tpu.trace_start"() <{level = 10 : i32, message = "nqe,nke->nqk"}> : () -> ()
    %cst_20 = arith.constant dense<0.000000e+00> : vector<8x8x8xf32>
    %26 = tpu.matmul %18, %19, %cst_20 {dimension_numbers = #tpu.dot_dimension_numbers<[2], [2], [1], [1], [0, 0, 0, 1, 1, 1], [0], [0]>} : vector<8x8x8xf32>, vector<8x8x8xf32>, vector<8x8x8xf32> -> vector<8x8x8xf32>
    "tpu.trace_stop"() : () -> ()
    %cst_21 = arith.constant 0.353553385 : f32
    %27 = vector.broadcast %cst_21 : f32 to vector<8x8x8xf32>
    %28 = arith.mulf %26, %27 : vector<8x8x8xf32>
    %29 = vector.broadcast %25 : vector<8x1x8xf32> to vector<8x8x8xf32>
    %30 = arith.addf %28, %29 : vector<8x8x8xf32>
    %cst_22 = arith.constant dense<0xFF800000> : vector<8x8xf32>
    %31 = vector.multi_reduction <maximumf>, %30, %cst_22 [2] : vector<8x8x8xf32> to vector<8x8xf32>
    %32 = vector.shape_cast %31 : vector<8x8xf32> to vector<8x8x1xf32>
    %33 = vector.broadcast %32 : vector<8x8x1xf32> to vector<8x8x8xf32>
    %34 = arith.subf %30, %33 : vector<8x8x8xf32>
    %35 = math.exp %34 : vector<8x8x8xf32>
    %cst_23 = arith.constant dense<0.000000e+00> : vector<8x8xf32>
    %36 = vector.multi_reduction <add>, %35, %cst_23 [2] : vector<8x8x8xf32> to vector<8x8xf32>
    %37 = vector.shape_cast %36 : vector<8x8xf32> to vector<8x8x1xf32>
    %38 = vector.broadcast %37 : vector<8x8x1xf32> to vector<8x8x8xf32>
    %39 = arith.divf %35, %38 : vector<8x8x8xf32>
    "tpu.trace_start"() <{level = 10 : i32, message = "nqk,nke->nqe"}> : () -> ()
    %cst_24 = arith.constant dense<0.000000e+00> : vector<8x8x8xf32>
    %40 = tpu.matmul %39, %20, %cst_24 {dimension_numbers = #tpu.dot_dimension_numbers<[2], [1], [1], [2], [0, 0, 0, 1, 1, 2], [0], [0]>} : vector<8x8x8xf32>, vector<8x8x8xf32>, vector<8x8x8xf32> -> vector<8x8x8xf32>
    "tpu.trace_stop"() : () -> ()
    %c0_25 = arith.constant 0 : index
    %c24 = arith.constant 24 : index
    %c0_26 = arith.constant 0 : index
    %41 = vector.load %arg2[%c0_25, %c24, %c0_26] : memref<8x32x32xf32, #tpu.memory_space<vmem>>, vector<8x8x32xf32>
    "tpu.trace_start"() <{level = 10 : i32, message = "nse,ned->nsd"}> : () -> ()
    %cst_27 = arith.constant dense<0.000000e+00> : vector<8x8x32xf32>
    %42 = tpu.matmul %40, %41, %cst_27 {dimension_numbers = #tpu.dot_dimension_numbers<[2], [1], [1], [2], [0, 0, 0, 1, 1, 2], [0], [0]>} : vector<8x8x8xf32>, vector<8x8x32xf32>, vector<8x8x32xf32> -> vector<8x8x32xf32>
    "tpu.trace_stop"() : () -> ()
    %43 = vector.shape_cast %42 : vector<8x8x32xf32> to vector<2x4x8x32xf32>
    %44 = vector.extract_strided_slice %43 {offsets = [0, 0, 0, 0], sizes = [2, 1, 8, 32], strides = [1, 1, 1, 1]} : vector<2x4x8x32xf32> to vector<2x1x8x32xf32>
    %45 = vector.shape_cast %44 : vector<2x1x8x32xf32> to vector<2x8x32xf32>
    %46 = vector.extract_strided_slice %43 {offsets = [0, 1, 0, 0], sizes = [2, 1, 8, 32], strides = [1, 1, 1, 1]} : vector<2x4x8x32xf32> to vector<2x1x8x32xf32>
    %47 = vector.shape_cast %46 : vector<2x1x8x32xf32> to vector<2x8x32xf32>
    %48 = arith.addf %45, %47 : vector<2x8x32xf32>
    %49 = vector.extract_strided_slice %43 {offsets = [0, 2, 0, 0], sizes = [2, 1, 8, 32], strides = [1, 1, 1, 1]} : vector<2x4x8x32xf32> to vector<2x1x8x32xf32>
    %50 = vector.shape_cast %49 : vector<2x1x8x32xf32> to vector<2x8x32xf32>
    %51 = arith.addf %48, %50 : vector<2x8x32xf32>
    %52 = vector.extract_strided_slice %43 {offsets = [0, 3, 0, 0], sizes = [2, 1, 8, 32], strides = [1, 1, 1, 1]} : vector<2x4x8x32xf32> to vector<2x1x8x32xf32>
    %53 = vector.shape_cast %52 : vector<2x1x8x32xf32> to vector<2x8x32xf32>
    %54 = arith.addf %51, %53 : vector<2x8x32xf32>
    %55 = vector.shape_cast %54 : vector<2x8x32xf32> to vector<16x32xf32>
    %56 = vector.broadcast %0 : vector<1x32xf32> to vector<16x32xf32>
    %57 = arith.addf %55, %56 : vector<16x32xf32>
    %58 = arith.addf %57, %7 : vector<16x32xf32>
    %cst_28 = arith.constant dense<0.000000e+00> : vector<16xf32>
    %59 = vector.multi_reduction <add>, %58, %cst_28 [1] : vector<16x32xf32> to vector<16xf32>
    %60 = vector.shape_cast %59 : vector<16xf32> to vector<16x1xf32>
    %cst_29 = arith.constant 3.200000e+01 : f32
    %61 = vector.broadcast %cst_29 : f32 to vector<16x1xf32>
    %62 = arith.divf %60, %61 : vector<16x1xf32>
    %63 = vector.broadcast %62 : vector<16x1xf32> to vector<16x32xf32>
    %64 = arith.subf %58, %63 : vector<16x32xf32>
    %65 = arith.mulf %64, %64 : vector<16x32xf32>
    %cst_30 = arith.constant dense<0.000000e+00> : vector<16xf32>
    %66 = vector.multi_reduction <add>, %65, %cst_30 [1] : vector<16x32xf32> to vector<16xf32>
    %67 = vector.shape_cast %66 : vector<16xf32> to vector<16x1xf32>
    %cst_31 = arith.constant 3.200000e+01 : f32
    %68 = vector.broadcast %cst_31 : f32 to vector<16x1xf32>
    %69 = arith.divf %67, %68 : vector<16x1xf32>
    %cst_32 = arith.constant 9.99999974E-6 : f32
    %70 = vector.broadcast %cst_32 : f32 to vector<16x1xf32>
    %71 = arith.addf %69, %70 : vector<16x1xf32>
    %72 = math.rsqrt %71 : vector<16x1xf32>
    %73 = vector.broadcast %72 : vector<16x1xf32> to vector<16x32xf32>
    %74 = arith.mulf %64, %73 : vector<16x32xf32>
    %75 = vector.broadcast %1 : vector<1x32xf32> to vector<16x32xf32>
    %76 = arith.mulf %74, %75 : vector<16x32xf32>
    %77 = vector.broadcast %2 : vector<1x32xf32> to vector<16x32xf32>
    %78 = arith.addf %76, %77 : vector<16x32xf32>
    %c0_33 = arith.constant 0 : index
    %c0_34 = arith.constant 0 : index
    %79 = vector.load %arg4[%c0_33, %c0_34] : memref<96x64xf32, #tpu.memory_space<vmem>>, vector<32x64xf32>
    %c32 = arith.constant 32 : index
    %c0_35 = arith.constant 0 : index
    %80 = vector.load %arg4[%c32, %c0_35] : memref<96x64xf32, #tpu.memory_space<vmem>>, vector<64x32xf32>
    %cst_36 = arith.constant dense<0.000000e+00> : vector<16x64xf32>
    %81 = tpu.matmul %78, %79, %cst_36 {dimension_numbers = #tpu.dot_dimension_numbers<[1], [0], [0], [1], [0, 0, 1, 1], [], []>} : vector<16x32xf32>, vector<32x64xf32>, vector<16x64xf32> -> vector<16x64xf32>
    %82 = vector.broadcast %3 : vector<1x64xf32> to vector<16x64xf32>
    %83 = arith.addf %81, %82 : vector<16x64xf32>
    %cst_37 = arith.constant 0.000000e+00 : f32
    %84 = vector.broadcast %cst_37 : f32 to vector<16x64xf32>
    %85 = arith.maximumf %83, %84 : vector<16x64xf32>
    %cst_38 = arith.constant dense<0.000000e+00> : vector<16x32xf32>
    %86 = tpu.matmul %85, %80, %cst_38 {dimension_numbers = #tpu.dot_dimension_numbers<[1], [0], [0], [1], [0, 0, 1, 1], [], []>} : vector<16x64xf32>, vector<64x32xf32>, vector<16x32xf32> -> vector<16x32xf32>
    %87 = vector.broadcast %4 : vector<1x32xf32> to vector<16x32xf32>
    %88 = arith.addf %86, %87 : vector<16x32xf32>
    %89 = arith.addf %88, %78 : vector<16x32xf32>
    %cst_39 = arith.constant dense<0.000000e+00> : vector<16xf32>
    %90 = vector.multi_reduction <add>, %89, %cst_39 [1] : vector<16x32xf32> to vector<16xf32>
    %91 = vector.shape_cast %90 : vector<16xf32> to vector<16x1xf32>
    %cst_40 = arith.constant 3.200000e+01 : f32
    %92 = vector.broadcast %cst_40 : f32 to vector<16x1xf32>
    %93 = arith.divf %91, %92 : vector<16x1xf32>
    %94 = vector.broadcast %93 : vector<16x1xf32> to vector<16x32xf32>
    %95 = arith.subf %89, %94 : vector<16x32xf32>
    %96 = arith.mulf %95, %95 : vector<16x32xf32>
    %cst_41 = arith.constant dense<0.000000e+00> : vector<16xf32>
    %97 = vector.multi_reduction <add>, %96, %cst_41 [1] : vector<16x32xf32> to vector<16xf32>
    %98 = vector.shape_cast %97 : vector<16xf32> to vector<16x1xf32>
    %cst_42 = arith.constant 3.200000e+01 : f32
    %99 = vector.broadcast %cst_42 : f32 to vector<16x1xf32>
    %100 = arith.divf %98, %99 : vector<16x1xf32>
    %cst_43 = arith.constant 9.99999974E-6 : f32
    %101 = vector.broadcast %cst_43 : f32 to vector<16x1xf32>
    %102 = arith.addf %100, %101 : vector<16x1xf32>
    %103 = math.rsqrt %102 : vector<16x1xf32>
    %104 = vector.broadcast %103 : vector<16x1xf32> to vector<16x32xf32>
    %105 = arith.mulf %95, %104 : vector<16x32xf32>
    %106 = vector.broadcast %5 : vector<1x32xf32> to vector<16x32xf32>
    %107 = arith.mulf %105, %106 : vector<16x32xf32>
    %108 = vector.broadcast %6 : vector<1x32xf32> to vector<16x32xf32>
    %109 = arith.addf %107, %108 : vector<16x32xf32>
    %c0_44 = arith.constant 0 : index
    %c0_45 = arith.constant 0 : index
    %110 = vector.load %arg6[%c0_44, %c0_45] : memref<16x32xf32, #tpu.memory_space<vmem>>, vector<16x32xf32>
    tpu.vector_store %arg6[%c0_44, %c0_45], %109 {strides = array<i32>} : memref<16x32xf32, #tpu.memory_space<vmem>>, vector<16x32xf32>,
    return
  }
}

</mosaic_0001>

<llo_original>
// kernel: encoder_block.1
$region0: #{encoder_block.1}
  #allocation0 [shape = 'u32[]', space=smem, size = 0x4, offset = 0x4, fixed_abs, tag = 'smem constant byte address 0x4 - core index']
  #allocation1 [shape = 'u32[72,128]{1,0:T(1,128)}', space=vmem, size = 0x9000, scoped, tag = 'internal scratch']
  %s0 = inlined_call_operand.vmem [shape: f32[16,32], index: 0, kind: input, shape index: {}]
  %s1 = inlined_call_operand.vmem [shape: f32[8,1,8], index: 1, kind: input, shape index: {}]
  %s2 = inlined_call_operand.hbm [shape: f32[8,32,32], index: 2, kind: input, shape index: {}]
  %s3 = inlined_call_operand.vmem [shape: f32[8,1,24], index: 3, kind: input, shape index: {}]
  %s4 = inlined_call_operand.vmem [shape: f32[96,64], index: 4, kind: input, shape index: {}]
  %s5 = inlined_call_operand.vmem [shape: f32[8,64], index: 5, kind: input, shape index: {}]
  %s6 = inlined_call_operand.hbm [shape: f32[16,32], index: 6, kind: output, shape index: {}]
  %s7 = sld [smem:[#allocation0]]
  $region38: #{encoder_block.1} parent=0
    _
  %s9 = ssub.s32 1, %s7
  %s10 = scalar_select 0, %s9, %s7
  $region1: #{encoder_block.1} parent=0
    #allocation2 [shape = 'u8[131072]{0}', space=vmem, size = 0x20000, scoped, tag = 'input window, operand 2, single buffered']
    #allocation3 [shape = 's32[1]{0}', space=sflag, size = 0x4, scoped, tag = 'scoped memory for encoder_block.1']
    #allocation4 [shape = 's32[1]{0}', space=sflag, size = 0x4, scoped, tag = 'scoped memory for encoder_block.1']
    #allocation5 [shape = 'u8[8192]{0}', space=vmem, size = 0x2000, scoped, tag = 'output window, operand 0, single buffered']
    %11 = vsyncpa [#allocation3], 0
    %12 = vsyncpa [#allocation4], 0
    // Predicated region
    $region2: #{encoder_block.1} parent=1 // pred_check
      _
    $region3: #{encoder_block.1} parent=1 // pred_check_branch
      %14 = sbr.rel (0) target = $region5
    $region4: #{encoder_block.1} parent=1 // pred_region
      _
    $region5: #{encoder_block.1} parent=1 // pred_fallthru
      _
    // Predicated region
    $region6: #{encoder_block.1} parent=1 // pred_check
      _
    $region7: #{encoder_block.1} parent=1 // pred_check_branch
      %16 = sbr.rel (0) target = $region9
    $region8: #{encoder_block.1} parent=1 // pred_region
      _
    $region9: #{encoder_block.1} parent=1 // pred_fallthru
      _
    // Predicated region
    $region10: #{encoder_block.1} parent=1 // pred_check
      _
    $region11: #{encoder_block.1} parent=1 // pred_check_branch
      %18 = sbr.rel (0) target = $region13
    $region12: #{encoder_block.1} parent=1 // pred_region
      %20 = vsyncadd [#allocation3], 0
      %s21 = sshll.u32 %s2, 4
      %s22 = int_to_ptr.hbm [resolvable:$true] %s21
      %s23 = sshll.u32 [#allocation2], 4
      %s24 = int_to_ptr.vmem [resolvable:$true] %s23
      %29 = dma.hbm_to_vmem [thread:$0]  %s22, 4096, %s24, [#allocation3], 128, 128, 8
    $region13: #{encoder_block.1} parent=1 // pred_fallthru
      _
    // Predicated region
    $region14: #{encoder_block.1} parent=1 // pred_check
      _
    $region15: #{encoder_block.1} parent=1 // pred_check_branch
      %31 = sbr.rel (0) target = $region17
    $region16: #{encoder_block.1} parent=1 // pred_region
      _
    $region17: #{encoder_block.1} parent=1 // pred_fallthru
      _
    // Predicated region
    $region18: #{encoder_block.1} parent=1 // pred_check
      _
    $region19: #{encoder_block.1} parent=1 // pred_check_branch
      %33 = sbr.rel (0) target = $region21
    $region20: #{encoder_block.1} parent=1 // pred_region
      _
    $region21: #{encoder_block.1} parent=1 // pred_fallthru
      _
    // Predicated region
    $region22: #{encoder_block.1} parent=1 // pred_check
      _
    $region23: #{encoder_block.1} parent=1 // pred_check_branch
      %35 = sbr.rel (0) target = $region25
    $region24: #{encoder_block.1} parent=1 // pred_region
      _
    $region25: #{encoder_block.1} parent=1 // pred_fallthru
      _
    // Predicated region
    $region26: #{encoder_block.1} parent=1 // pred_check
      _
    $region27: #{encoder_block.1} parent=1 // pred_check_branch
      %37 = sbr.rel (0) target = $region29
    $region28: #{encoder_block.1} parent=1 // pred_region
      %39 = dma.done [#allocation3], 4096
    $region29: #{encoder_block.1} parent=1 // pred_fallthru
      _
    %v40 = vld [vmem:[%s5] sm:$0x1]
    %v41 = vld [vmem:[%s5 + $0x1] sm:$0x1]
    %v42 = vld [vmem:[%s5 + $0x2] sm:$0x1]
    %v43 = vld [vmem:[%s5 + $0x3] sm:$0x1]
    %v44 = vld [vmem:[%s5 + $0x4] sm:$0x1]
    %v45 = vld [vmem:[%s5 + $0x5] sm:$0x1]
    %v46 = vld [vmem:[%s5 + $0x6] sm:$0x1]
    %v47 = vld [vmem:[%s0] sm:$0xff]
    %v48 = vld [vmem:[%s0 + $0x8] sm:$0xff]
    %v49 = vld [vmem:[#allocation2] sm:$0xff]
    %v50 = vld [vmem:[#allocation2 + $0x8] sm:$0xff]
    %v51 = vld [vmem:[#allocation2 + $0x10] sm:$0xff]
    %v52 = vld [vmem:[#allocation2 + $0x20] sm:$0xff]
    %v53 = vld [vmem:[#allocation2 + $0x28] sm:$0xff]
    %v54 = vld [vmem:[#allocation2 + $0x30] sm:$0xff]
    %v55 = vld [vmem:[#allocation2 + $0x40] sm:$0xff]
    %v56 = vld [vmem:[#allocation2 + $0x48] sm:$0xff]
    %v57 = vld [vmem:[#allocation2 + $0x50] sm:$0xff]
    %v58 = vld [vmem:[#allocation2 + $0x60] sm:$0xff]
    %v59 = vld [vmem:[#allocation2 + $0x68] sm:$0xff]
    %v60 = vld [vmem:[#allocation2 + $0x70] sm:$0xff]
    %v61 = vld [vmem:[#allocation2 + $0x80] sm:$0xff]
    %v62 = vld [vmem:[#allocation2 + $0x88] sm:$0xff]
    %v63 = vld [vmem:[#allocation2 + $0x90] sm:$0xff]
    %v64 = vld [vmem:[#allocation2 + $0xa0] sm:$0xff]
    %v65 = vld [vmem:[#allocation2 + $0xa8] sm:$0xff]
    %v66 = vld [vmem:[#allocation2 + $0xb0] sm:$0xff]
    %v67 = vld [vmem:[#allocation2 + $0xc0] sm:$0xff]
    %v68 = vld [vmem:[#allocation2 + $0xc8] sm:$0xff]
    %v69 = vld [vmem:[#allocation2 + $0xd0] sm:$0xff]
    %v70 = vld [vmem:[#allocation2 + $0xe0] sm:$0xff]
    %v71 = vld [vmem:[#allocation2 + $0xe8] sm:$0xff]
    %v72 = vld [vmem:[#allocation2 + $0xf0] sm:$0xff]
    %v73 = vld [vmem:[%s3] sm:$0x1]
    %v74 = vld [vmem:[%s3 + $0x1] sm:$0x1]
    %v75 = vld [vmem:[%s3 + $0x2] sm:$0x1]
    %v76 = vld [vmem:[%s3 + $0x3] sm:$0x1]
    %v77 = vld [vmem:[%s3 + $0x4] sm:$0x1]
    %v78 = vld [vmem:[%s3 + $0x5] sm:$0x1]
    %v79 = vld [vmem:[%s3 + $0x6] sm:$0x1]
    %v80 = vld [vmem:[%s3 + $0x7] sm:$0x1]
    %v89 = vperm.slane %v73, 0
    %v90 = vperm.slane %v74, 0
    %v91 = vperm.slane %v75, 0
    %v92 = vperm.slane %v76, 0
    %v93 = vperm.slane %v77, 0
    %v94 = vperm.slane %v78, 0
    %v95 = vperm.slane %v79, 0
    %v96 = vperm.slane %v80, 0
    %vm105 = vcmask 261120
    %v107 = vsel %vm105, %v47, 0
    %v110 = vsel %vm105, %v49, 0
    %v113 = vsel %vm105, %v50, 0
    %v116 = vsel %vm105, %v51, 0
    %118 = vmatpush.xpose.msra.mxu0 0.0
    %119 = vmatpush.xpose.msra.mxu0 0.0
    %120 = vmatpush.xpose.msra.mxu0 0.0
    %121 = vmatpush.xpose.msra.mxu0 0.0
    %122 = vmatpush.xpose.msra.mxu0 0.0
    %123 = vmatpush.xpose.msra.mxu0 0.0
    %124 = vmatpush.xpose.msra.mxu0 0.0
    %125 = vmatpush.xpose.msra.mxu0 0.0
    %126 = vmatpush.xpose.msra.mxu0 0.0
    %127 = vmatpush.xpose.msra.mxu0 0.0
    %128 = vmatpush.xpose.msra.mxu0 0.0
    %129 = vmatpush.xpose.msra.mxu0 0.0
    %130 = vmatpush.xpose.msra.mxu0 0.0
    %131 = vmatpush.xpose.msra.mxu0 %v116
    %132 = vmatpush.xpose.msra.mxu0 %v113
    %133 = vmatpush.xpose.msra.mxu0 %v110
    %134 = vmatmul.f32.gmra.mxu0 %v107
    %v135 = vpop.f32.mrf.mxu0
    %v136 = vadd.f32 %v89, %v135
    %137 = vdwg.mxu0
    %v139 = vsel %vm105, %v52, 0
    %v142 = vsel %vm105, %v53, 0
    %v145 = vsel %vm105, %v54, 0
    %147 = vmatpush.xpose.msra.mxu0 0.0
    %148 = vmatpush.xpose.msra.mxu0 0.0
    %149 = vmatpush.xpose.msra.mxu0 0.0
    %150 = vmatpush.xpose.msra.mxu0 0.0
    %151 = vmatpush.xpose.msra.mxu0 0.0
    %152 = vmatpush.xpose.msra.mxu0 0.0
    %153 = vmatpush.xpose.msra.mxu0 0.0
    %154 = vmatpush.xpose.msra.mxu0 0.0
    %155 = vmatpush.xpose.msra.mxu0 0.0
    %156 = vmatpush.xpose.msra.mxu0 0.0
    %157 = vmatpush.xpose.msra.mxu0 0.0
    %158 = vmatpush.xpose.msra.mxu0 0.0
    %159 = vmatpush.xpose.msra.mxu0 0.0
    %160 = vmatpush.xpose.msra.mxu0 %v145
    %161 = vmatpush.xpose.msra.mxu0 %v142
    %162 = vmatpush.xpose.msra.mxu0 %v139
    %163 = vmatmul.f32.gmra.mxu0 %v107
    %v164 = vpop.f32.mrf.mxu0
    %v165 = vadd.f32 %v90, %v164
    %166 = vdwg.mxu0
    %v168 = vsel %vm105, %v55, 0
    %v171 = vsel %vm105, %v56, 0
    %v174 = vsel %vm105, %v57, 0
    %176 = vmatpush.xpose.msra.mxu0 0.0
    %177 = vmatpush.xpose.msra.mxu0 0.0
    %178 = vmatpush.xpose.msra.mxu0 0.0
    %179 = vmatpush.xpose.msra.mxu0 0.0
    %180 = vmatpush.xpose.msra.mxu0 0.0
    %181 = vmatpush.xpose.msra.mxu0 0.0
    %182 = vmatpush.xpose.msra.mxu0 0.0
    %183 = vmatpush.xpose.msra.mxu0 0.0
    %184 = vmatpush.xpose.msra.mxu0 0.0
    %185 = vmatpush.xpose.msra.mxu0 0.0
    %186 = vmatpush.xpose.msra.mxu0 0.0
    %187 = vmatpush.xpose.msra.mxu0 0.0
    %188 = vmatpush.xpose.msra.mxu0 0.0
    %189 = vmatpush.xpose.msra.mxu0 %v174
    %190 = vmatpush.xpose.msra.mxu0 %v171
    %191 = vmatpush.xpose.msra.mxu0 %v168
    %192 = vmatmul.f32.gmra.mxu0 %v107
    %v193 = vpop.f32.mrf.mxu0
    %v194 = vadd.f32 %v91, %v193
    %195 = vdwg.mxu0
    %v197 = vsel %vm105, %v58, 0
    %v200 = vsel %vm105, %v59, 0
    %v203 = vsel %vm105, %v60, 0
    %205 = vmatpush.xpose.msra.mxu0 0.0
    %206 = vmatpush.xpose.msra.mxu0 0.0
    %207 = vmatpush.xpose.msra.mxu0 0.0
    %208 = vmatpush.xpose.msra.mxu0 0.0
    %209 = vmatpush.xpose.msra.mxu0 0.0
    %210 = vmatpush.xpose.msra.mxu0 0.0
    %211 = vmatpush.xpose.msra.mxu0 0.0
    %212 = vmatpush.xpose.msra.mxu0 0.0
    %213 = vmatpush.xpose.msra.mxu0 0.0
    %214 = vmatpush.xpose.msra.mxu0 0.0
    %215 = vmatpush.xpose.msra.mxu0 0.0
    %216 = vmatpush.xpose.msra.mxu0 0.0
    %217 = vmatpush.xpose.msra.mxu0 0.0
    %218 = vmatpush.xpose.msra.mxu0 %v203
    %219 = vmatpush.xpose.msra.mxu0 %v200
    %220 = vmatpush.xpose.msra.mxu0 %v197
    %221 = vmatmul.f32.gmra.mxu0 %v107
    %v222 = vpop.f32.mrf.mxu0
    %v223 = vadd.f32 %v92, %v222
    %224 = vdwg.mxu0
    %v226 = vsel %vm105, %v48, 0
    %v229 = vsel %vm105, %v61, 0
    %v232 = vsel %vm105, %v62, 0
    %v235 = vsel %vm105, %v63, 0
    %237 = vmatpush.xpose.msra.mxu0 0.0
    %238 = vmatpush.xpose.msra.mxu0 0.0
    %239 = vmatpush.xpose.msra.mxu0 0.0
    %240 = vmatpush.xpose.msra.mxu0 0.0
    %241 = vmatpush.xpose.msra.mxu0 0.0
    %242 = vmatpush.xpose.msra.mxu0 0.0
    %243 = vmatpush.xpose.msra.mxu0 0.0
    %244 = vmatpush.xpose.msra.mxu0 0.0
    %245 = vmatpush.xpose.msra.mxu0 0.0
    %246 = vmatpush.xpose.msra.mxu0 0.0
    %247 = vmatpush.xpose.msra.mxu0 0.0
    %248 = vmatpush.xpose.msra.mxu0 0.0
    %249 = vmatpush.xpose.msra.mxu0 0.0
    %250 = vmatpush.xpose.msra.mxu0 %v235
    %251 = vmatpush.xpose.msra.mxu0 %v232
    %252 = vmatpush.xpose.msra.mxu0 %v229
    %253 = vmatmul.f32.gmra.mxu0 %v226
    %v254 = vpop.f32.mrf.mxu0
    %v255 = vadd.f32 %v93, %v254
    %256 = vdwg.mxu0
    %v258 = vsel %vm105, %v64, 0
    %v261 = vsel %vm105, %v65, 0
    %v264 = vsel %vm105, %v66, 0
    %266 = vmatpush.xpose.msra.mxu0 0.0
    %267 = vmatpush.xpose.msra.mxu0 0.0
    %268 = vmatpush.xpose.msra.mxu0 0.0
    %269 = vmatpush.xpose.msra.mxu0 0.0
    %270 = vmatpush.xpose.msra.mxu0 0.0
    %271 = vmatpush.xpose.msra.mxu0 0.0
    %272 = vmatpush.xpose.msra.mxu0 0.0
    %273 = vmatpush.xpose.msra.mxu0 0.0
    %274 = vmatpush.xpose.msra.mxu0 0.0
    %275 = vmatpush.xpose.msra.mxu0 0.0
    %276 = vmatpush.xpose.msra.mxu0 0.0
    %277 = vmatpush.xpose.msra.mxu0 0.0
    %278 = vmatpush.xpose.msra.mxu0 0.0
    %279 = vmatpush.xpose.msra.mxu0 %v264
    %280 = vmatpush.xpose.msra.mxu0 %v261
    %281 = vmatpush.xpose.msra.mxu0 %v258
    %282 = vmatmul.f32.gmra.mxu0 %v226
    %v283 = vpop.f32.mrf.mxu0
    %v284 = vadd.f32 %v94, %v283
    %285 = vdwg.mxu0
    %v287 = vsel %vm105, %v67, 0
    %v290 = vsel %vm105, %v68, 0
    %v293 = vsel %vm105, %v69, 0
    %295 = vmatpush.xpose.msra.mxu0 0.0
    %296 = vmatpush.xpose.msra.mxu0 0.0
    %297 = vmatpush.xpose.msra.mxu0 0.0
    %298 = vmatpush.xpose.msra.mxu0 0.0
    %299 = vmatpush.xpose.msra.mxu0 0.0
    %300 = vmatpush.xpose.msra.mxu0 0.0
    %301 = vmatpush.xpose.msra.mxu0 0.0
    %302 = vmatpush.xpose.msra.mxu0 0.0
    %303 = vmatpush.xpose.msra.mxu0 0.0
    %304 = vmatpush.xpose.msra.mxu0 0.0
    %305 = vmatpush.xpose.msra.mxu0 0.0
    %306 = vmatpush.xpose.msra.mxu0 0.0
    %307 = vmatpush.xpose.msra.mxu0 0.0
    %308 = vmatpush.xpose.msra.mxu0 %v293
    %309 = vmatpush.xpose.msra.mxu0 %v290
    %310 = vmatpush.xpose.msra.mxu0 %v287
    %311 = vmatmul.f32.gmra.mxu0 %v226
    %v312 = vpop.f32.mrf.mxu0
    %v313 = vadd.f32 %v95, %v312
    %314 = vdwg.mxu0
    %v316 = vsel %vm105, %v70, 0
    %v319 = vsel %vm105, %v71, 0
    %v322 = vsel %vm105, %v72, 0
    %324 = vmatpush.xpose.msra.mxu0 0.0
    %325 = vmatpush.xpose.msra.mxu0 0.0
    %326 = vmatpush.xpose.msra.mxu0 0.0
    %327 = vmatpush.xpose.msra.mxu0 0.0
    %328 = vmatpush.xpose.msra.mxu0 0.0
    %329 = vmatpush.xpose.msra.mxu0 0.0
    %330 = vmatpush.xpose.msra.mxu0 0.0
    %331 = vmatpush.xpose.msra.mxu0 0.0
    %332 = vmatpush.xpose.msra.mxu0 0.0
    %333 = vmatpush.xpose.msra.mxu0 0.0
    %334 = vmatpush.xpose.msra.mxu0 0.0
    %335 = vmatpush.xpose.msra.mxu0 0.0
    %336 = vmatpush.xpose.msra.mxu0 0.0
    %337 = vmatpush.xpose.msra.mxu0 %v322
    %338 = vmatpush.xpose.msra.mxu0 %v319
    %339 = vmatpush.xpose.msra.mxu0 %v316
    %340 = vmatmul.f32.gmra.mxu0 %v226
    %v341 = vpop.f32.mrf.mxu0
    %v342 = vadd.f32 %v96, %v341
    %343 = vdwg.mxu0
    %v344 = vld [vmem:[%s1] sm:$0x1]
    %v345 = vld [vmem:[%s1 + $0x1] sm:$0x1]
    %v346 = vld [vmem:[%s1 + $0x2] sm:$0x1]
    %v347 = vld [vmem:[%s1 + $0x3] sm:$0x1]
    %v348 = vld [vmem:[%s1 + $0x4] sm:$0x1]
    %v349 = vld [vmem:[%s1 + $0x5] sm:$0x1]
    %v350 = vld [vmem:[%s1 + $0x6] sm:$0x1]
    %v351 = vld [vmem:[%s1 + $0x7] sm:$0x1]
    %v352 = vsub.f32 %v344, 1.0
    %v353 = vsub.f32 %v345, 1.0
    %v354 = vsub.f32 %v346, 1.0
    %v355 = vsub.f32 %v347, 1.0
    %v356 = vsub.f32 %v348, 1.0
    %v357 = vsub.f32 %v349, 1.0
    %v358 = vsub.f32 %v350, 1.0
    %v359 = vsub.f32 %v351, 1.0
    %v360 = vmul.f32 %v352, 1e+09
    %v361 = vmul.f32 %v353, 1e+09
    %v362 = vmul.f32 %v354, 1e+09
    %v363 = vmul.f32 %v355, 1e+09
    %v364 = vmul.f32 %v356, 1e+09
    %v365 = vmul.f32 %v357, 1e+09
    %v366 = vmul.f32 %v358, 1e+09
    %v367 = vmul.f32 %v359, 1e+09
    %369 = vrot.lane.b32.xlu0 %v136, 120
    %v370 = vpop.permute.xlu0 %369
    %vm371 = vcmask 64512
    %v372 = vsel %vm371, %v136, 0
    %v374 = vsel %vm371, %v370, 0
    %376 = vmatpush.xpose.msra.mxu0 0.0
    %377 = vmatpush.xpose.msra.mxu0 0.0
    %378 = vmatpush.xpose.msra.mxu0 0.0
    %379 = vmatpush.xpose.msra.mxu0 0.0
    %380 = vmatpush.xpose.msra.mxu0 0.0
    %381 = vmatpush.xpose.msra.mxu0 0.0
    %382 = vmatpush.xpose.msra.mxu0 0.0
    %383 = vmatpush.xpose.msra.mxu0 0.0
    %384 = vmatpush.xpose.msra.mxu0 0.0
    %385 = vmatpush.xpose.msra.mxu0 0.0
    %386 = vmatpush.xpose.msra.mxu0 0.0
    %387 = vmatpush.xpose.msra.mxu0 0.0
    %388 = vmatpush.xpose.msra.mxu0 0.0
    %389 = vmatpush.xpose.msra.mxu0 0.0
    %390 = vmatpush.xpose.msra.mxu0 0.0
    %391 = vmatpush.xpose.msra.mxu0 %v374
    %392 = vmatmul.f32.gmra.mxu0 %v372
    %v393 = vpop.f32.mrf.mxu0
    %v394 = vadd.f32 0.0, %v393
    %395 = vdwg.mxu0
    %397 = vrot.lane.b32.xlu0 %v165, 120
    %v398 = vpop.permute.xlu0 %397
    %v399 = vsel %vm371, %v165, 0
    %v401 = vsel %vm371, %v398, 0
    %403 = vmatpush.xpose.msra.mxu0 0.0
    %404 = vmatpush.xpose.msra.mxu0 0.0
    %405 = vmatpush.xpose.msra.mxu0 0.0
    %406 = vmatpush.xpose.msra.mxu0 0.0
    %407 = vmatpush.xpose.msra.mxu0 0.0
    %408 = vmatpush.xpose.msra.mxu0 0.0
    %409 = vmatpush.xpose.msra.mxu0 0.0
    %410 = vmatpush.xpose.msra.mxu0 0.0
    %411 = vmatpush.xpose.msra.mxu0 0.0
    %412 = vmatpush.xpose.msra.mxu0 0.0
    %413 = vmatpush.xpose.msra.mxu0 0.0
    %414 = vmatpush.xpose.msra.mxu0 0.0
    %415 = vmatpush.xpose.msra.mxu0 0.0
    %416 = vmatpush.xpose.msra.mxu0 0.0
    %417 = vmatpush.xpose.msra.mxu0 0.0
    %418 = vmatpush.xpose.msra.mxu0 %v401
    %419 = vmatmul.f32.gmra.mxu0 %v399
    %v420 = vpop.f32.mrf.mxu0
    %v421 = vadd.f32 0.0, %v420
    %422 = vdwg.mxu0
    %424 = vrot.lane.b32.xlu0 %v194, 120
    %v425 = vpop.permute.xlu0 %424
    %v426 = vsel %vm371, %v194, 0
    %v428 = vsel %vm371, %v425, 0
    %430 = vmatpush.xpose.msra.mxu0 0.0
    %431 = vmatpush.xpose.msra.mxu0 0.0
    %432 = vmatpush.xpose.msra.mxu0 0.0
    %433 = vmatpush.xpose.msra.mxu0 0.0
    %434 = vmatpush.xpose.msra.mxu0 0.0
    %435 = vmatpush.xpose.msra.mxu0 0.0
    %436 = vmatpush.xpose.msra.mxu0 0.0
    %437 = vmatpush.xpose.msra.mxu0 0.0
    %438 = vmatpush.xpose.msra.mxu0 0.0
    %439 = vmatpush.xpose.msra.mxu0 0.0
    %440 = vmatpush.xpose.msra.mxu0 0.0
    %441 = vmatpush.xpose.msra.mxu0 0.0
    %442 = vmatpush.xpose.msra.mxu0 0.0
    %443 = vmatpush.xpose.msra.mxu0 0.0
    %444 = vmatpush.xpose.msra.mxu0 0.0
    %445 = vmatpush.xpose.msra.mxu0 %v428
    %446 = vmatmul.f32.gmra.mxu0 %v426
    %v447 = vpop.f32.mrf.mxu0
    %v448 = vadd.f32 0.0, %v447
    %449 = vdwg.mxu0
    %451 = vrot.lane.b32.xlu0 %v223, 120
    %v452 = vpop.permute.xlu0 %451
    %v453 = vsel %vm371, %v223, 0
    %v455 = vsel %vm371, %v452, 0
    %457 = vmatpush.xpose.msra.mxu0 0.0
    %458 = vmatpush.xpose.msra.mxu0 0.0
    %459 = vmatpush.xpose.msra.mxu0 0.0
    %460 = vmatpush.xpose.msra.mxu0 0.0
    %461 = vmatpush.xpose.msra.mxu0 0.0
    %462 = vmatpush.xpose.msra.mxu0 0.0
    %463 = vmatpush.xpose.msra.mxu0 0.0
    %464 = vmatpush.xpose.msra.mxu0 0.0
    %465 = vmatpush.xpose.msra.mxu0 0.0
    %466 = vmatpush.xpose.msra.mxu0 0.0
    %467 = vmatpush.xpose.msra.mxu0 0.0
    %468 = vmatpush.xpose.msra.mxu0 0.0
    %469 = vmatpush.xpose.msra.mxu0 0.0
    %470 = vmatpush.xpose.msra.mxu0 0.0
    %471 = vmatpush.xpose.msra.mxu0 0.0
    %472 = vmatpush.xpose.msra.mxu0 %v455
    %473 = vmatmul.f32.gmra.mxu0 %v453
    %v474 = vpop.f32.mrf.mxu0
    %v475 = vadd.f32 0.0, %v474
    %476 = vdwg.mxu0
    %478 = vrot.lane.b32.xlu0 %v255, 120
    %v479 = vpop.permute.xlu0 %478
    %v480 = vsel %vm371, %v255, 0
    %v482 = vsel %vm371, %v479, 0
    %484 = vmatpush.xpose.msra.mxu0 0.0
    %485 = vmatpush.xpose.msra.mxu0 0.0
    %486 = vmatpush.xpose.msra.mxu0 0.0
    %487 = vmatpush.xpose.msra.mxu0 0.0
    %488 = vmatpush.xpose.msra.mxu0 0.0
    %489 = vmatpush.xpose.msra.mxu0 0.0
    %490 = vmatpush.xpose.msra.mxu0 0.0
    %491 = vmatpush.xpose.msra.mxu0 0.0
    %492 = vmatpush.xpose.msra.mxu0 0.0
    %493 = vmatpush.xpose.msra.mxu0 0.0
    %494 = vmatpush.xpose.msra.mxu0 0.0
    %495 = vmatpush.xpose.msra.mxu0 0.0
    %496 = vmatpush.xpose.msra.mxu0 0.0
    %497 = vmatpush.xpose.msra.mxu0 0.0
    %498 = vmatpush.xpose.msra.mxu0 0.0
    %499 = vmatpush.xpose.msra.mxu0 %v482
    %500 = vmatmul.f32.gmra.mxu0 %v480
    %v501 = vpop.f32.mrf.mxu0
    %v502 = vadd.f32 0.0, %v501
    %503 = vdwg.mxu0
    %505 = vrot.lane.b32.xlu0 %v284, 120
    %v506 = vpop.permute.xlu0 %505
    %v507 = vsel %vm371, %v284, 0
    %v509 = vsel %vm371, %v506, 0
    %511 = vmatpush.xpose.msra.mxu0 0.0
    %512 = vmatpush.xpose.msra.mxu0 0.0
    %513 = vmatpush.xpose.msra.mxu0 0.0
    %514 = vmatpush.xpose.msra.mxu0 0.0
    %515 = vmatpush.xpose.msra.mxu0 0.0
    %516 = vmatpush.xpose.msra.mxu0 0.0
    %517 = vmatpush.xpose.msra.mxu0 0.0
    %518 = vmatpush.xpose.msra.mxu0 0.0
    %519 = vmatpush.xpose.msra.mxu0 0.0
    %520 = vmatpush.xpose.msra.mxu0 0.0
    %521 = vmatpush.xpose.msra.mxu0 0.0
    %522 = vmatpush.xpose.msra.mxu0 0.0
    %523 = vmatpush.xpose.msra.mxu0 0.0
    %524 = vmatpush.xpose.msra.mxu0 0.0
    %525 = vmatpush.xpose.msra.mxu0 0.0
    %526 = vmatpush.xpose.msra.mxu0 %v509
    %527 = vmatmul.f32.gmra.mxu0 %v507
    %v528 = vpop.f32.mrf.mxu0
    %v529 = vadd.f32 0.0, %v528
    %530 = vdwg.mxu0
    %532 = vrot.lane.b32.xlu0 %v313, 120
    %v533 = vpop.permute.xlu0 %532
    %v534 = vsel %vm371, %v313, 0
    %v536 = vsel %vm371, %v533, 0
    %538 = vmatpush.xpose.msra.mxu0 0.0
    %539 = vmatpush.xpose.msra.mxu0 0.0
    %540 = vmatpush.xpose.msra.mxu0 0.0
    %541 = vmatpush.xpose.msra.mxu0 0.0
    %542 = vmatpush.xpose.msra.mxu0 0.0
    %543 = vmatpush.xpose.msra.mxu0 0.0
    %544 = vmatpush.xpose.msra.mxu0 0.0
    %545 = vmatpush.xpose.msra.mxu0 0.0
    %546 = vmatpush.xpose.msra.mxu0 0.0
    %547 = vmatpush.xpose.msra.mxu0 0.0
    %548 = vmatpush.xpose.msra.mxu0 0.0
    %549 = vmatpush.xpose.msra.mxu0 0.0
    %550 = vmatpush.xpose.msra.mxu0 0.0
    %551 = vmatpush.xpose.msra.mxu0 0.0
    %552 = vmatpush.xpose.msra.mxu0 0.0
    %553 = vmatpush.xpose.msra.mxu0 %v536
    %554 = vmatmul.f32.gmra.mxu0 %v534
    %v555 = vpop.f32.mrf.mxu0
    %v556 = vadd.f32 0.0, %v555
    %557 = vdwg.mxu0
    %559 = vrot.lane.b32.xlu0 %v342, 120
    %v560 = vpop.permute.xlu0 %559
    %v561 = vsel %vm371, %v342, 0
    %v563 = vsel %vm371, %v560, 0
    %565 = vmatpush.xpose.msra.mxu0 0.0
    %566 = vmatpush.xpose.msra.mxu0 0.0
    %567 = vmatpush.xpose.msra.mxu0 0.0
    %568 = vmatpush.xpose.msra.mxu0 0.0
    %569 = vmatpush.xpose.msra.mxu0 0.0
    %570 = vmatpush.xpose.msra.mxu0 0.0
    %571 = vmatpush.xpose.msra.mxu0 0.0
    %572 = vmatpush.xpose.msra.mxu0 0.0
    %573 = vmatpush.xpose.msra.mxu0 0.0
    %574 = vmatpush.xpose.msra.mxu0 0.0
    %575 = vmatpush.xpose.msra.mxu0 0.0
    %576 = vmatpush.xpose.msra.mxu0 0.0
    %577 = vmatpush.xpose.msra.mxu0 0.0
    %578 = vmatpush.xpose.msra.mxu0 0.0
    %579 = vmatpush.xpose.msra.mxu0 0.0
    %580 = vmatpush.xpose.msra.mxu0 %v563
    %581 = vmatmul.f32.gmra.mxu0 %v561
    %v582 = vpop.f32.mrf.mxu0
    %v583 = vadd.f32 0.0, %v582
    %584 = vdwg.mxu0
    %v585 = vmul.f32 %v394, 0.35355338
    %v586 = vmul.f32 %v421, 0.35355338
    %v587 = vmul.f32 %v448, 0.35355338
    %v588 = vmul.f32 %v475, 0.35355338
    %v589 = vmul.f32 %v502, 0.35355338
    %v590 = vmul.f32 %v529, 0.35355338
    %v591 = vmul.f32 %v556, 0.35355338
    %v592 = vmul.f32 %v583, 0.35355338
    %v601 = vperm.slane %v360, 0
    %v602 = vperm.slane %v361, 0
    %v603 = vperm.slane %v362, 0
    %v604 = vperm.slane %v363, 0
    %v605 = vperm.slane %v364, 0
    %v606 = vperm.slane %v365, 0
    %v607 = vperm.slane %v366, 0
    %v608 = vperm.slane %v367, 0
    %v617 = vadd.f32 %v585, %v601
    %v618 = vadd.f32 %v586, %v602
    %v619 = vadd.f32 %v587, %v603
    %v620 = vadd.f32 %v588, %v604
    %v621 = vadd.f32 %v589, %v605
    %v622 = vadd.f32 %v590, %v606
    %v623 = vadd.f32 %v591, %v607
    %v624 = vadd.f32 %v592, %v608
    %v625 = vsel %vm371, %v617, -inf
    %626 = vmax.xlane.f32.xlu0 %v625
    %v627 = vpop.xlane.xlu0 %626
    %v628 = vsel %vm371, %v618, -inf
    %629 = vmax.xlane.f32.xlu0 %v628
    %v630 = vpop.xlane.xlu0 %629
    %v631 = vsel %vm371, %v619, -inf
    %632 = vmax.xlane.f32.xlu0 %v631
    %v633 = vpop.xlane.xlu0 %632
    %v634 = vsel %vm371, %v620, -inf
    %635 = vmax.xlane.f32.xlu0 %v634
    %v636 = vpop.xlane.xlu0 %635
    %v637 = vsel %vm371, %v621, -inf
    %638 = vmax.xlane.f32.xlu0 %v637
    %v639 = vpop.xlane.xlu0 %638
    %v640 = vsel %vm371, %v622, -inf
    %641 = vmax.xlane.f32.xlu0 %v640
    %v642 = vpop.xlane.xlu0 %641
    %v643 = vsel %vm371, %v623, -inf
    %644 = vmax.xlane.f32.xlu0 %v643
    %v645 = vpop.xlane.xlu0 %644
    %v646 = vsel %vm371, %v624, -inf
    %647 = vmax.xlane.f32.xlu0 %v646
    %v648 = vpop.xlane.xlu0 %647
    %v649 = vsub.f32 %v617, %v627
    %v650 = vsub.f32 %v618, %v630
    %v651 = vsub.f32 %v619, %v633
    %v652 = vsub.f32 %v620, %v636
    %v653 = vsub.f32 %v621, %v639
    %v654 = vsub.f32 %v622, %v642
    %v655 = vsub.f32 %v623, %v645
    %v656 = vsub.f32 %v624, %v648
    %v657 = vmul.f32 %v649, 1.442695
    %v658 = vpow.pop %v657
    %v659 = vmul.f32 %v650, 1.442695
    %v660 = vpow.pop %v659
    %v661 = vmul.f32 %v651, 1.442695
    %v662 = vpow.pop %v661
    %v663 = vmul.f32 %v652, 1.442695
    %v664 = vpow.pop %v663
    %v665 = vmul.f32 %v653, 1.442695
    %v666 = vpow.pop %v665
    %v667 = vmul.f32 %v654, 1.442695
    %v668 = vpow.pop %v667
    %v669 = vmul.f32 %v655, 1.442695
    %v670 = vpow.pop %v669
    %v671 = vmul.f32 %v656, 1.442695
    %v672 = vpow.pop %v671
    %v673 = vsel %vm371, %v658, 0.0
    %674 = vadd.xlane.f32.xlu0 %v673
    %v675 = vpop.xlane.xlu0 %674
    %v676 = vsel %vm371, %v660, 0.0
    %677 = vadd.xlane.f32.xlu0 %v676
    %v678 = vpop.xlane.xlu0 %677
    %v679 = vsel %vm371, %v662, 0.0
    %680 = vadd.xlane.f32.xlu0 %v679
    %v681 = vpop.xlane.xlu0 %680
    %v682 = vsel %vm371, %v664, 0.0
    %683 = vadd.xlane.f32.xlu0 %v682
    %v684 = vpop.xlane.xlu0 %683
    %v685 = vsel %vm371, %v666, 0.0
    %686 = vadd.xlane.f32.xlu0 %v685
    %v687 = vpop.xlane.xlu0 %686
    %v688 = vsel %vm371, %v668, 0.0
    %689 = vadd.xlane.f32.xlu0 %v688
    %v690 = vpop.xlane.xlu0 %689
    %v691 = vsel %vm371, %v670, 0.0
    %692 = vadd.xlane.f32.xlu0 %v691
    %v693 = vpop.xlane.xlu0 %692
    %v694 = vsel %vm371, %v672, 0.0
    %695 = vadd.xlane.f32.xlu0 %v694
    %v696 = vpop.xlane.xlu0 %695
    %v697 = vrcp.pop %v675
    %v698 = vmul.f32 %v675, %v697
    %v699 = vsub.f32 1.0, %v698
    %v700 = vmul.f32 %v697, %v699
    %v701 = vadd.f32 %v697, %v700
    %vm702 = vweird.f32 %v675
    %vm703 = vweird.f32 %v697
    %vm704 = vmor %vm702, %vm703
    %v705 = vsel %vm704, %v697, %v701
    %v706 = vand.u32 2147483647, %v675
    %vm707 = vcmp.eq.f32.partialorder %v706, 8.507059e+37
    %v708 = vand.u32 %v675, 2147483648
    %v709 = vor.u32 1.1754944e-38, %v708
    %v710 = vsel %vm707, %v709, %v705
    %v711 = vmul.f32 %v658, %v710
    %v712 = vrcp.pop %v678
    %v713 = vmul.f32 %v678, %v712
    %v714 = vsub.f32 1.0, %v713
    %v715 = vmul.f32 %v712, %v714
    %v716 = vadd.f32 %v712, %v715
    %vm717 = vweird.f32 %v678
    %vm718 = vweird.f32 %v712
    %vm719 = vmor %vm717, %vm718
    %v720 = vsel %vm719, %v712, %v716
    %v721 = vand.u32 2147483647, %v678
    %vm722 = vcmp.eq.f32.partialorder %v721, 8.507059e+37
    %v723 = vand.u32 %v678, 2147483648
    %v724 = vor.u32 1.1754944e-38, %v723
    %v725 = vsel %vm722, %v724, %v720
    %v726 = vmul.f32 %v660, %v725
    %v727 = vrcp.pop %v681
    %v728 = vmul.f32 %v681, %v727
    %v729 = vsub.f32 1.0, %v728
    %v730 = vmul.f32 %v727, %v729
    %v731 = vadd.f32 %v727, %v730
    %vm732 = vweird.f32 %v681
    %vm733 = vweird.f32 %v727
    %vm734 = vmor %vm732, %vm733
    %v735 = vsel %vm734, %v727, %v731
    %v736 = vand.u32 2147483647, %v681
    %vm737 = vcmp.eq.f32.partialorder %v736, 8.507059e+37
    %v738 = vand.u32 %v681, 2147483648
    %v739 = vor.u32 1.1754944e-38, %v738
    %v740 = vsel %vm737, %v739, %v735
    %v741 = vmul.f32 %v662, %v740
    %v742 = vrcp.pop %v684
    %v743 = vmul.f32 %v684, %v742
    %v744 = vsub.f32 1.0, %v743
    %v745 = vmul.f32 %v742, %v744
    %v746 = vadd.f32 %v742, %v745
    %vm747 = vweird.f32 %v684
    %vm748 = vweird.f32 %v742
    %vm749 = vmor %vm747, %vm748
    %v750 = vsel %vm749, %v742, %v746
    %v751 = vand.u32 2147483647, %v684
    %vm752 = vcmp.eq.f32.partialorder %v751, 8.507059e+37
    %v753 = vand.u32 %v684, 2147483648
    %v754 = vor.u32 1.1754944e-38, %v753
    %v755 = vsel %vm752, %v754, %v750
    %v756 = vmul.f32 %v664, %v755
    %v757 = vrcp.pop %v687
    %v758 = vmul.f32 %v687, %v757
    %v759 = vsub.f32 1.0, %v758
    %v760 = vmul.f32 %v757, %v759
    %v761 = vadd.f32 %v757, %v760
    %vm762 = vweird.f32 %v687
    %vm763 = vweird.f32 %v757
    %vm764 = vmor %vm762, %vm763
    %v765 = vsel %vm764, %v757, %v761
    %v766 = vand.u32 2147483647, %v687
    %vm767 = vcmp.eq.f32.partialorder %v766, 8.507059e+37
    %v768 = vand.u32 %v687, 2147483648
    %v769 = vor.u32 1.1754944e-38, %v768
    %v770 = vsel %vm767, %v769, %v765
    %v771 = vmul.f32 %v666, %v770
    %v772 = vrcp.pop %v690
    %v773 = vmul.f32 %v690, %v772
    %v774 = vsub.f32 1.0, %v773
    %v775 = vmul.f32 %v772, %v774
    %v776 = vadd.f32 %v772, %v775
    %vm777 = vweird.f32 %v690
    %vm778 = vweird.f32 %v772
    %vm779 = vmor %vm777, %vm778
    %v780 = vsel %vm779, %v772, %v776
    %v781 = vand.u32 2147483647, %v690
    %vm782 = vcmp.eq.f32.partialorder %v781, 8.507059e+37
    %v783 = vand.u32 %v690, 2147483648
    %v784 = vor.u32 1.1754944e-38, %v783
    %v785 = vsel %vm782, %v784, %v780
    %v786 = vmul.f32 %v668, %v785
    %v787 = vrcp.pop %v693
    %v788 = vmul.f32 %v693, %v787
    %v789 = vsub.f32 1.0, %v788
    %v790 = vmul.f32 %v787, %v789
    %v791 = vadd.f32 %v787, %v790
    %vm792 = vweird.f32 %v693
    %vm793 = vweird.f32 %v787
    %vm794 = vmor %vm792, %vm793
    %v795 = vsel %vm794, %v787, %v791
    %v796 = vand.u32 2147483647, %v693
    %vm797 = vcmp.eq.f32.partialorder %v796, 8.507059e+37
    %v798 = vand.u32 %v693, 2147483648
    %v799 = vor.u32 1.1754944e-38, %v798
    %v800 = vsel %vm797, %v799, %v795
    %v801 = vmul.f32 %v670, %v800
    %v802 = vrcp.pop %v696
    %v803 = vmul.f32 %v696, %v802
    %v804 = vsub.f32 1.0, %v803
    %v805 = vmul.f32 %v802, %v804
    %v806 = vadd.f32 %v802, %v805
    %vm807 = vweird.f32 %v696
    %vm808 = vweird.f32 %v802
    %vm809 = vmor %vm807, %vm808
    %v810 = vsel %vm809, %v802, %v806
    %v811 = vand.u32 2147483647, %v696
    %vm812 = vcmp.eq.f32.partialorder %v811, 8.507059e+37
    %v813 = vand.u32 %v696, 2147483648
    %v814 = vor.u32 1.1754944e-38, %v813
    %v815 = vsel %vm812, %v814, %v810
    %v816 = vmul.f32 %v672, %v815
    %817 = vrot.lane.b32.xlu0 %v136, 112
    %v818 = vpop.permute.xlu0 %817
    %v821 = vsel %vm371, %v711, 0
    %823 = vmatpush.msra.mxu0 0.0
    %824 = vmatpush.msra.mxu0 0.0
    %825 = vmatpush.msra.mxu0 0.0
    %826 = vmatpush.msra.mxu0 0.0
    %827 = vmatpush.msra.mxu0 0.0
    %828 = vmatpush.msra.mxu0 0.0
    %829 = vmatpush.msra.mxu0 0.0
    %830 = vmatpush.msra.mxu0 0.0
    %831 = vmatpush.msra.mxu0 0.0
    %832 = vmatpush.msra.mxu0 0.0
    %833 = vmatpush.msra.mxu0 0.0
    %834 = vmatpush.msra.mxu0 0.0
    %835 = vmatpush.msra.mxu0 0.0
    %836 = vmatpush.msra.mxu0 0.0
    %837 = vmatpush.msra.mxu0 0.0
    %838 = vmatpush.msra.mxu0 %v818
    %839 = vmatmul.f32.gmra.mxu0 %v821
    %v840 = vpop.f32.mrf.mxu0
    %v841 = vadd.f32 0.0, %v840
    %842 = vdwg.mxu0
    %843 = vrot.lane.b32.xlu0 %v165, 112
    %v844 = vpop.permute.xlu0 %843
    %v847 = vsel %vm371, %v726, 0
    %849 = vmatpush.msra.mxu0 0.0
    %850 = vmatpush.msra.mxu0 0.0
    %851 = vmatpush.msra.mxu0 0.0
    %852 = vmatpush.msra.mxu0 0.0
    %853 = vmatpush.msra.mxu0 0.0
    %854 = vmatpush.msra.mxu0 0.0
    %855 = vmatpush.msra.mxu0 0.0
    %856 = vmatpush.msra.mxu0 0.0
    %857 = vmatpush.msra.mxu0 0.0
    %858 = vmatpush.msra.mxu0 0.0
    %859 = vmatpush.msra.mxu0 0.0
    %860 = vmatpush.msra.mxu0 0.0
    %861 = vmatpush.msra.mxu0 0.0
    %862 = vmatpush.msra.mxu0 0.0
    %863 = vmatpush.msra.mxu0 0.0
    %864 = vmatpush.msra.mxu0 %v844
    %865 = vmatmul.f32.gmra.mxu0 %v847
    %v866 = vpop.f32.mrf.mxu0
    %v867 = vadd.f32 0.0, %v866
    %868 = vdwg.mxu0
    %869 = vrot.lane.b32.xlu0 %v194, 112
    %v870 = vpop.permute.xlu0 %869
    %v873 = vsel %vm371, %v741, 0
    %875 = vmatpush.msra.mxu0 0.0
    %876 = vmatpush.msra.mxu0 0.0
    %877 = vmatpush.msra.mxu0 0.0
    %878 = vmatpush.msra.mxu0 0.0
    %879 = vmatpush.msra.mxu0 0.0
    %880 = vmatpush.msra.mxu0 0.0
    %881 = vmatpush.msra.mxu0 0.0
    %882 = vmatpush.msra.mxu0 0.0
    %883 = vmatpush.msra.mxu0 0.0
    %884 = vmatpush.msra.mxu0 0.0
    %885 = vmatpush.msra.mxu0 0.0
    %886 = vmatpush.msra.mxu0 0.0
    %887 = vmatpush.msra.mxu0 0.0
    %888 = vmatpush.msra.mxu0 0.0
    %889 = vmatpush.msra.mxu0 0.0
    %890 = vmatpush.msra.mxu0 %v870
    %891 = vmatmul.f32.gmra.mxu0 %v873
    %v892 = vpop.f32.mrf.mxu0
    %v893 = vadd.f32 0.0, %v892
    %894 = vdwg.mxu0
    %895 = vrot.lane.b32.xlu0 %v223, 112
    %v896 = vpop.permute.xlu0 %895
    %v899 = vsel %vm371, %v756, 0
    %901 = vmatpush.msra.mxu0 0.0
    %902 = vmatpush.msra.mxu0 0.0
    %903 = vmatpush.msra.mxu0 0.0
    %904 = vmatpush.msra.mxu0 0.0
    %905 = vmatpush.msra.mxu0 0.0
    %906 = vmatpush.msra.mxu0 0.0
    %907 = vmatpush.msra.mxu0 0.0
    %908 = vmatpush.msra.mxu0 0.0
    %909 = vmatpush.msra.mxu0 0.0
    %910 = vmatpush.msra.mxu0 0.0
    %911 = vmatpush.msra.mxu0 0.0
    %912 = vmatpush.msra.mxu0 0.0
    %913 = vmatpush.msra.mxu0 0.0
    %914 = vmatpush.msra.mxu0 0.0
    %915 = vmatpush.msra.mxu0 0.0
    %916 = vmatpush.msra.mxu0 %v896
    %917 = vmatmul.f32.gmra.mxu0 %v899
    %v918 = vpop.f32.mrf.mxu0
    %v919 = vadd.f32 0.0, %v918
    %920 = vdwg.mxu0
    %921 = vrot.lane.b32.xlu0 %v255, 112
    %v922 = vpop.permute.xlu0 %921
    %v925 = vsel %vm371, %v771, 0
    %927 = vmatpush.msra.mxu0 0.0
    %928 = vmatpush.msra.mxu0 0.0
    %929 = vmatpush.msra.mxu0 0.0
    %930 = vmatpush.msra.mxu0 0.0
    %931 = vmatpush.msra.mxu0 0.0
    %932 = vmatpush.msra.mxu0 0.0
    %933 = vmatpush.msra.mxu0 0.0
    %934 = vmatpush.msra.mxu0 0.0
    %935 = vmatpush.msra.mxu0 0.0
    %936 = vmatpush.msra.mxu0 0.0
    %937 = vmatpush.msra.mxu0 0.0
    %938 = vmatpush.msra.mxu0 0.0
    %939 = vmatpush.msra.mxu0 0.0
    %940 = vmatpush.msra.mxu0 0.0
    %941 = vmatpush.msra.mxu0 0.0
    %942 = vmatpush.msra.mxu0 %v922
    %943 = vmatmul.f32.gmra.mxu0 %v925
    %v944 = vpop.f32.mrf.mxu0
    %v945 = vadd.f32 0.0, %v944
    %946 = vdwg.mxu0
    %947 = vrot.lane.b32.xlu0 %v284, 112
    %v948 = vpop.permute.xlu0 %947
    %v951 = vsel %vm371, %v786, 0
    %953 = vmatpush.msra.mxu0 0.0
    %954 = vmatpush.msra.mxu0 0.0
    %955 = vmatpush.msra.mxu0 0.0
    %956 = vmatpush.msra.mxu0 0.0
    %957 = vmatpush.msra.mxu0 0.0
    %958 = vmatpush.msra.mxu0 0.0
    %959 = vmatpush.msra.mxu0 0.0
    %960 = vmatpush.msra.mxu0 0.0
    %961 = vmatpush.msra.mxu0 0.0
    %962 = vmatpush.msra.mxu0 0.0
    %963 = vmatpush.msra.mxu0 0.0
    %964 = vmatpush.msra.mxu0 0.0
    %965 = vmatpush.msra.mxu0 0.0
    %966 = vmatpush.msra.mxu0 0.0
    %967 = vmatpush.msra.mxu0 0.0
    %968 = vmatpush.msra.mxu0 %v948
    %969 = vmatmul.f32.gmra.mxu0 %v951
    %v970 = vpop.f32.mrf.mxu0
    %v971 = vadd.f32 0.0, %v970
    %972 = vdwg.mxu0
    %973 = vrot.lane.b32.xlu0 %v313, 112
    %v974 = vpop.permute.xlu0 %973
    %v977 = vsel %vm371, %v801, 0
    %979 = vmatpush.msra.mxu0 0.0
    %980 = vmatpush.msra.mxu0 0.0
    %981 = vmatpush.msra.mxu0 0.0
    %982 = vmatpush.msra.mxu0 0.0
    %983 = vmatpush.msra.mxu0 0.0
    %984 = vmatpush.msra.mxu0 0.0
    %985 = vmatpush.msra.mxu0 0.0
    %986 = vmatpush.msra.mxu0 0.0
    %987 = vmatpush.msra.mxu0 0.0
    %988 = vmatpush.msra.mxu0 0.0
    %989 = vmatpush.msra.mxu0 0.0
    %990 = vmatpush.msra.mxu0 0.0
    %991 = vmatpush.msra.mxu0 0.0
    %992 = vmatpush.msra.mxu0 0.0
    %993 = vmatpush.msra.mxu0 0.0
    %994 = vmatpush.msra.mxu0 %v974
    %995 = vmatmul.f32.gmra.mxu0 %v977
    %v996 = vpop.f32.mrf.mxu0
    %v997 = vadd.f32 0.0, %v996
    %998 = vdwg.mxu0
    %999 = vrot.lane.b32.xlu0 %v342, 112
    %v1000 = vpop.permute.xlu0 %999
    %v1003 = vsel %vm371, %v816, 0
    %1005 = vmatpush.msra.mxu0 0.0
    %1006 = vmatpush.msra.mxu0 0.0
    %1007 = vmatpush.msra.mxu0 0.0
    %1008 = vmatpush.msra.mxu0 0.0
    %1009 = vmatpush.msra.mxu0 0.0
    %1010 = vmatpush.msra.mxu0 0.0
    %1011 = vmatpush.msra.mxu0 0.0
    %1012 = vmatpush.msra.mxu0 0.0
    %1013 = vmatpush.msra.mxu0 0.0
    %1014 = vmatpush.msra.mxu0 0.0
    %1015 = vmatpush.msra.mxu0 0.0
    %1016 = vmatpush.msra.mxu0 0.0
    %1017 = vmatpush.msra.mxu0 0.0
    %1018 = vmatpush.msra.mxu0 0.0
    %1019 = vmatpush.msra.mxu0 0.0
    %1020 = vmatpush.msra.mxu0 %v1000
    %1021 = vmatmul.f32.gmra.mxu0 %v1003
    %v1022 = vpop.f32.mrf.mxu0
    %v1023 = vadd.f32 0.0, %v1022
    %1024 = vdwg.mxu0
    %v1025 = vld [vmem:[#allocation2 + $0x18] sm:$0xff]
    %v1026 = vld [vmem:[#allocation2 + $0x38] sm:$0xff]
    %v1027 = vld [vmem:[#allocation2 + $0x58] sm:$0xff]
    %v1028 = vld [vmem:[#allocation2 + $0x78] sm:$0xff]
    %v1029 = vld [vmem:[#allocation2 + $0x98] sm:$0xff]
    %v1030 = vld [vmem:[#allocation2 + $0xb8] sm:$0xff]
    %v1031 = vld [vmem:[#allocation2 + $0xd8] sm:$0xff]
    %v1032 = vld [vmem:[#allocation2 + $0xf8] sm:$0xff]
    %v1034 = vsel %vm371, %v841, 0
    %1036 = vmatpush.msra.mxu0 0.0
    %1037 = vmatpush.msra.mxu0 0.0
    %1038 = vmatpush.msra.mxu0 0.0
    %1039 = vmatpush.msra.mxu0 0.0
    %1040 = vmatpush.msra.mxu0 0.0
    %1041 = vmatpush.msra.mxu0 0.0
    %1042 = vmatpush.msra.mxu0 0.0
    %1043 = vmatpush.msra.mxu0 0.0
    %1044 = vmatpush.msra.mxu0 0.0
    %1045 = vmatpush.msra.mxu0 0.0
    %1046 = vmatpush.msra.mxu0 0.0
    %1047 = vmatpush.msra.mxu0 0.0
    %1048 = vmatpush.msra.mxu0 0.0
    %1049 = vmatpush.msra.mxu0 0.0
    %1050 = vmatpush.msra.mxu0 0.0
    %1051 = vmatpush.msra.mxu0 %v1025
    %1052 = vmatmul.f32.gmra.mxu0 %v1034
    %v1053 = vpop.f32.mrf.mxu0
    %v1054 = vadd.f32 0.0, %v1053
    %1055 = vdwg.mxu0
    %v1057 = vsel %vm371, %v867, 0
    %1059 = vmatpush.msra.mxu0 0.0
    %1060 = vmatpush.msra.mxu0 0.0
    %1061 = vmatpush.msra.mxu0 0.0
    %1062 = vmatpush.msra.mxu0 0.0
    %1063 = vmatpush.msra.mxu0 0.0
    %1064 = vmatpush.msra.mxu0 0.0
    %1065 = vmatpush.msra.mxu0 0.0
    %1066 = vmatpush.msra.mxu0 0.0
    %1067 = vmatpush.msra.mxu0 0.0
    %1068 = vmatpush.msra.mxu0 0.0
    %1069 = vmatpush.msra.mxu0 0.0
    %1070 = vmatpush.msra.mxu0 0.0
    %1071 = vmatpush.msra.mxu0 0.0
    %1072 = vmatpush.msra.mxu0 0.0
    %1073 = vmatpush.msra.mxu0 0.0
    %1074 = vmatpush.msra.mxu0 %v1026
    %1075 = vmatmul.f32.gmra.mxu0 %v1057
    %v1076 = vpop.f32.mrf.mxu0
    %v1077 = vadd.f32 0.0, %v1076
    %1078 = vdwg.mxu0
    %v1080 = vsel %vm371, %v893, 0
    %1082 = vmatpush.msra.mxu0 0.0
    %1083 = vmatpush.msra.mxu0 0.0
    %1084 = vmatpush.msra.mxu0 0.0
    %1085 = vmatpush.msra.mxu0 0.0
    %1086 = vmatpush.msra.mxu0 0.0
    %1087 = vmatpush.msra.mxu0 0.0
    %1088 = vmatpush.msra.mxu0 0.0
    %1089 = vmatpush.msra.mxu0 0.0
    %1090 = vmatpush.msra.mxu0 0.0
    %1091 = vmatpush.msra.mxu0 0.0
    %1092 = vmatpush.msra.mxu0 0.0
    %1093 = vmatpush.msra.mxu0 0.0
    %1094 = vmatpush.msra.mxu0 0.0
    %1095 = vmatpush.msra.mxu0 0.0
    %1096 = vmatpush.msra.mxu0 0.0
    %1097 = vmatpush.msra.mxu0 %v1027
    %1098 = vmatmul.f32.gmra.mxu0 %v1080
    %v1099 = vpop.f32.mrf.mxu0
    %v1100 = vadd.f32 0.0, %v1099
    %1101 = vdwg.mxu0
    %v1103 = vsel %vm371, %v919, 0
    %1105 = vmatpush.msra.mxu0 0.0
    %1106 = vmatpush.msra.mxu0 0.0
    %1107 = vmatpush.msra.mxu0 0.0
    %1108 = vmatpush.msra.mxu0 0.0
    %1109 = vmatpush.msra.mxu0 0.0
    %1110 = vmatpush.msra.mxu0 0.0
    %1111 = vmatpush.msra.mxu0 0.0
    %1112 = vmatpush.msra.mxu0 0.0
    %1113 = vmatpush.msra.mxu0 0.0
    %1114 = vmatpush.msra.mxu0 0.0
    %1115 = vmatpush.msra.mxu0 0.0
    %1116 = vmatpush.msra.mxu0 0.0
    %1117 = vmatpush.msra.mxu0 0.0
    %1118 = vmatpush.msra.mxu0 0.0
    %1119 = vmatpush.msra.mxu0 0.0
    %1120 = vmatpush.msra.mxu0 %v1028
    %1121 = vmatmul.f32.gmra.mxu0 %v1103
    %v1122 = vpop.f32.mrf.mxu0
    %v1123 = vadd.f32 0.0, %v1122
    %1124 = vdwg.mxu0
    %v1126 = vsel %vm371, %v945, 0
    %1128 = vmatpush.msra.mxu0 0.0
    %1129 = vmatpush.msra.mxu0 0.0
    %1130 = vmatpush.msra.mxu0 0.0
    %1131 = vmatpush.msra.mxu0 0.0
    %1132 = vmatpush.msra.mxu0 0.0
    %1133 = vmatpush.msra.mxu0 0.0
    %1134 = vmatpush.msra.mxu0 0.0
    %1135 = vmatpush.msra.mxu0 0.0
    %1136 = vmatpush.msra.mxu0 0.0
    %1137 = vmatpush.msra.mxu0 0.0
    %1138 = vmatpush.msra.mxu0 0.0
    %1139 = vmatpush.msra.mxu0 0.0
    %1140 = vmatpush.msra.mxu0 0.0
    %1141 = vmatpush.msra.mxu0 0.0
    %1142 = vmatpush.msra.mxu0 0.0
    %1143 = vmatpush.msra.mxu0 %v1029
    %1144 = vmatmul.f32.gmra.mxu0 %v1126
    %v1145 = vpop.f32.mrf.mxu0
    %v1146 = vadd.f32 0.0, %v1145
    %1147 = vdwg.mxu0
    %v1149 = vsel %vm371, %v971, 0
    %1151 = vmatpush.msra.mxu0 0.0
    %1152 = vmatpush.msra.mxu0 0.0
    %1153 = vmatpush.msra.mxu0 0.0
    %1154 = vmatpush.msra.mxu0 0.0
    %1155 = vmatpush.msra.mxu0 0.0
    %1156 = vmatpush.msra.mxu0 0.0
    %1157 = vmatpush.msra.mxu0 0.0
    %1158 = vmatpush.msra.mxu0 0.0
    %1159 = vmatpush.msra.mxu0 0.0
    %1160 = vmatpush.msra.mxu0 0.0
    %1161 = vmatpush.msra.mxu0 0.0
    %1162 = vmatpush.msra.mxu0 0.0
    %1163 = vmatpush.msra.mxu0 0.0
    %1164 = vmatpush.msra.mxu0 0.0
    %1165 = vmatpush.msra.mxu0 0.0
    %1166 = vmatpush.msra.mxu0 %v1030
    %1167 = vmatmul.f32.gmra.mxu0 %v1149
    %v1168 = vpop.f32.mrf.mxu0
    %v1169 = vadd.f32 0.0, %v1168
    %1170 = vdwg.mxu0
    %v1172 = vsel %vm371, %v997, 0
    %1174 = vmatpush.msra.mxu0 0.0
    %1175 = vmatpush.msra.mxu0 0.0
    %1176 = vmatpush.msra.mxu0 0.0
    %1177 = vmatpush.msra.mxu0 0.0
    %1178 = vmatpush.msra.mxu0 0.0
    %1179 = vmatpush.msra.mxu0 0.0
    %1180 = vmatpush.msra.mxu0 0.0
    %1181 = vmatpush.msra.mxu0 0.0
    %1182 = vmatpush.msra.mxu0 0.0
    %1183 = vmatpush.msra.mxu0 0.0
    %1184 = vmatpush.msra.mxu0 0.0
    %1185 = vmatpush.msra.mxu0 0.0
    %1186 = vmatpush.msra.mxu0 0.0
    %1187 = vmatpush.msra.mxu0 0.0
    %1188 = vmatpush.msra.mxu0 0.0
    %1189 = vmatpush.msra.mxu0 %v1031
    %1190 = vmatmul.f32.gmra.mxu0 %v1172
    %v1191 = vpop.f32.mrf.mxu0
    %v1192 = vadd.f32 0.0, %v1191
    %1193 = vdwg.mxu0
    %v1195 = vsel %vm371, %v1023, 0
    %1197 = vmatpush.msra.mxu0 0.0
    %1198 = vmatpush.msra.mxu0 0.0
    %1199 = vmatpush.msra.mxu0 0.0
    %1200 = vmatpush.msra.mxu0 0.0
    %1201 = vmatpush.msra.mxu0 0.0
    %1202 = vmatpush.msra.mxu0 0.0
    %1203 = vmatpush.msra.mxu0 0.0
    %1204 = vmatpush.msra.mxu0 0.0
    %1205 = vmatpush.msra.mxu0 0.0
    %1206 = vmatpush.msra.mxu0 0.0
    %1207 = vmatpush.msra.mxu0 0.0
    %1208 = vmatpush.msra.mxu0 0.0
    %1209 = vmatpush.msra.mxu0 0.0
    %1210 = vmatpush.msra.mxu0 0.0
    %1211 = vmatpush.msra.mxu0 0.0
    %1212 = vmatpush.msra.mxu0 %v1032
    %1213 = vmatmul.f32.gmra.mxu0 %v1195
    %v1214 = vpop.f32.mrf.mxu0
    %v1215 = vadd.f32 0.0, %v1214
    %1216 = vdwg.mxu0
    %v1217 = vadd.f32 %v1054, %v1077
    %v1218 = vadd.f32 %v1146, %v1169
    %v1219 = vadd.f32 %v1217, %v1100
    %v1220 = vadd.f32 %v1218, %v1192
    %v1221 = vadd.f32 %v1219, %v1123
    %v1222 = vadd.f32 %v1220, %v1215
    %v1223 = vperm.slane %v40, 0
    %v1224 = vadd.f32 %v1221, %v1223
    %v1225 = vadd.f32 %v1222, %v1223
    %v1226 = vadd.f32 %v1224, %v47
    %v1227 = vadd.f32 %v1225, %v48
    %v1228 = vsel %vm105, %v1226, 0.0
    %1229 = vadd.xlane.f32.xlu0 %v1228
    %v1230 = vpop.xlane.xlu0 %1229
    %v1231 = vsel %vm105, %v1227, 0.0
    %1232 = vadd.xlane.f32.xlu0 %v1231
    %v1233 = vpop.xlane.xlu0 %1232
    %v1234 = vrcp.pop 32.0
    %v1235 = vmul.f32 32.0, %v1234
    %v1236 = vsub.f32 1.0, %v1235
    %v1237 = vmul.f32 %v1234, %v1236
    %v1238 = vadd.f32 %v1234, %v1237
    %vm1239 = vweird.f32 %v1234
    %v1240 = vsel %vm1239, %v1234, %v1238
    %v1241 = vmul.f32 %v1230, %v1240
    %v1242 = vmul.f32 %v1233, %v1240
    %v1243 = vsub.f32 %v1226, %v1241
    %v1244 = vsub.f32 %v1227, %v1242
    %v1245 = vmul.f32 %v1243, %v1243
    %v1246 = vmul.f32 %v1244, %v1244
    %v1247 = vsel %vm105, %v1245, 0.0
    %1248 = vadd.xlane.f32.xlu0 %v1247
    %v1249 = vpop.xlane.xlu0 %1248
    %v1250 = vsel %vm105, %v1246, 0.0
    %1251 = vadd.xlane.f32.xlu0 %v1250
    %v1252 = vpop.xlane.xlu0 %1251
    %v1253 = vmul.f32 %v1249, %v1240
    %v1254 = vmul.f32 %v1252, %v1240
    %v1255 = vadd.f32 %v1253, 1e-05
    %v1256 = vadd.f32 %v1254, 1e-05
    %v1257 = vrsqrt.pop %v1255
    %v1258 = vmul.f32 %v1257, %v1255
    %v1259 = vmul.f32 %v1258, %v1257
    %v1260 = vmul.f32 0.5, %v1259
    %v1261 = vsub.f32 1.5, %v1260
    %v1262 = vmul.f32 %v1257, %v1261
    %vm1263 = vweird.f32 %v1255
    %vm1264 = vweird.f32 %v1257
    %vm1265 = vmor %vm1263, %vm1264
    %v1266 = vsel %vm1265, %v1257, %v1262
    %v1267 = vrsqrt.pop %v1256
    %v1268 = vmul.f32 %v1267, %v1256
    %v1269 = vmul.f32 %v1268, %v1267
    %v1270 = vmul.f32 0.5, %v1269
    %v1271 = vsub.f32 1.5, %v1270
    %v1272 = vmul.f32 %v1267, %v1271
    %vm1273 = vweird.f32 %v1256
    %vm1274 = vweird.f32 %v1267
    %vm1275 = vmor %vm1273, %vm1274
    %v1276 = vsel %vm1275, %v1267, %v1272
    %v1277 = vmul.f32 %v1243, %v1266
    %v1278 = vmul.f32 %v1244, %v1276
    %v1279 = vperm.slane %v41, 0
    %v1280 = vmul.f32 %v1277, %v1279
    %v1281 = vmul.f32 %v1278, %v1279
    %v1282 = vperm.slane %v42, 0
    %v1283 = vadd.f32 %v1280, %v1282
    %v1284 = vadd.f32 %v1281, %v1282
    %v1285 = vld [vmem:[%s4] sm:$0xff]
    %v1286 = vld [vmem:[%s4 + $0x8] sm:$0xff]
    %v1287 = vld [vmem:[%s4 + $0x10] sm:$0xff]
    %v1288 = vld [vmem:[%s4 + $0x18] sm:$0xff]
    %v1289 = vld [vmem:[%s4 + $0x20] sm:$0xff]
    %v1290 = vld [vmem:[%s4 + $0x28] sm:$0xff]
    %v1291 = vld [vmem:[%s4 + $0x30] sm:$0xff]
    %v1292 = vld [vmem:[%s4 + $0x38] sm:$0xff]
    %v1293 = vld [vmem:[%s4 + $0x40] sm:$0xff]
    %v1294 = vld [vmem:[%s4 + $0x48] sm:$0xff]
    %v1295 = vld [vmem:[%s4 + $0x50] sm:$0xff]
    %v1296 = vld [vmem:[%s4 + $0x58] sm:$0xff]
    %v1297 = vperm.slane %v43, 0
    %v1299 = vsel %vm105, %v1283, 0
    %v1302 = vsel %vm105, %v1284, 0
    %1304 = vmatpush.msra.mxu0 0.0
    %1305 = vmatpush.msra.mxu0 0.0
    %1306 = vmatpush.msra.mxu0 0.0
    %1307 = vmatpush.msra.mxu0 0.0
    %1308 = vmatpush.msra.mxu0 0.0
    %1309 = vmatpush.msra.mxu0 0.0
    %1310 = vmatpush.msra.mxu0 0.0
    %1311 = vmatpush.msra.mxu0 0.0
    %1312 = vmatpush.msra.mxu0 0.0
    %1313 = vmatpush.msra.mxu0 0.0
    %1314 = vmatpush.msra.mxu0 0.0
    %1315 = vmatpush.msra.mxu0 0.0
    %1316 = vmatpush.msra.mxu0 %v1288
    %1317 = vmatpush.msra.mxu0 %v1287
    %1318 = vmatpush.msra.mxu0 %v1286
    %1319 = vmatpush.msra.mxu0 %v1285
    %1320 = vmatmul.f32.gmra.mxu0 %v1299
    %v1321 = vpop.f32.mrf.mxu0
    %v1322 = vadd.f32 %v1297, %v1321
    %1323 = vmatmul.f32.gmra.mxu0 %v1302
    %v1324 = vpop.f32.mrf.mxu0
    %v1325 = vadd.f32 %v1297, %v1324
    %1326 = vdwg.mxu0
    %v1327 = vmax.f32 %v1322, 0.0
    %v1328 = vmax.f32 %v1325, 0.0
    %v1329 = vperm.slane %v44, 0
    %vm1330 = vcmask 523264
    %v1332 = vsel %vm1330, %v1327, 0
    %v1335 = vsel %vm1330, %v1328, 0
    %1337 = vmatpush.msra.mxu0 0.0
    %1338 = vmatpush.msra.mxu0 0.0
    %1339 = vmatpush.msra.mxu0 0.0
    %1340 = vmatpush.msra.mxu0 0.0
    %1341 = vmatpush.msra.mxu0 0.0
    %1342 = vmatpush.msra.mxu0 0.0
    %1343 = vmatpush.msra.mxu0 0.0
    %1344 = vmatpush.msra.mxu0 0.0
    %1345 = vmatpush.msra.mxu0 %v1296
    %1346 = vmatpush.msra.mxu0 %v1295
    %1347 = vmatpush.msra.mxu0 %v1294
    %1348 = vmatpush.msra.mxu0 %v1293
    %1349 = vmatpush.msra.mxu0 %v1292
    %1350 = vmatpush.msra.mxu0 %v1291
    %1351 = vmatpush.msra.mxu0 %v1290
    %1352 = vmatpush.msra.mxu0 %v1289
    %1353 = vmatmul.f32.gmra.mxu0 %v1332
    %v1354 = vpop.f32.mrf.mxu0
    %v1355 = vadd.f32 %v1329, %v1354
    %1356 = vmatmul.f32.gmra.mxu0 %v1335
    %v1357 = vpop.f32.mrf.mxu0
    %v1358 = vadd.f32 %v1329, %v1357
    %1359 = vdwg.mxu0
    %v1360 = vadd.f32 %v1355, %v1283
    %v1361 = vadd.f32 %v1358, %v1284
    %v1362 = vsel %vm105, %v1360, 0.0
    %1363 = vadd.xlane.f32.xlu0 %v1362
    %v1364 = vpop.xlane.xlu0 %1363
    %v1365 = vsel %vm105, %v1361, 0.0
    %1366 = vadd.xlane.f32.xlu0 %v1365
    %v1367 = vpop.xlane.xlu0 %1366
    %v1368 = vmul.f32 %v1364, %v1240
    %v1369 = vmul.f32 %v1367, %v1240
    %v1370 = vsub.f32 %v1360, %v1368
    %v1371 = vsub.f32 %v1361, %v1369
    %v1372 = vmul.f32 %v1370, %v1370
    %v1373 = vmul.f32 %v1371, %v1371
    %v1374 = vsel %vm105, %v1372, 0.0
    %1375 = vadd.xlane.f32.xlu0 %v1374
    %v1376 = vpop.xlane.xlu0 %1375
    %v1377 = vsel %vm105, %v1373, 0.0
    %1378 = vadd.xlane.f32.xlu0 %v1377
    %v1379 = vpop.xlane.xlu0 %1378
    %v1380 = vmul.f32 %v1376, %v1240
    %v1381 = vmul.f32 %v1379, %v1240
    %v1382 = vadd.f32 %v1380, 1e-05
    %v1383 = vadd.f32 %v1381, 1e-05
    %v1384 = vrsqrt.pop %v1382
    %v1385 = vmul.f32 %v1384, %v1382
    %v1386 = vmul.f32 %v1385, %v1384
    %v1387 = vmul.f32 0.5, %v1386
    %v1388 = vsub.f32 1.5, %v1387
    %v1389 = vmul.f32 %v1384, %v1388
    %vm1390 = vweird.f32 %v1382
    %vm1391 = vweird.f32 %v1384
    %vm1392 = vmor %vm1390, %vm1391
    %v1393 = vsel %vm1392, %v1384, %v1389
    %v1394 = vrsqrt.pop %v1383
    %v1395 = vmul.f32 %v1394, %v1383
    %v1396 = vmul.f32 %v1395, %v1394
    %v1397 = vmul.f32 0.5, %v1396
    %v1398 = vsub.f32 1.5, %v1397
    %v1399 = vmul.f32 %v1394, %v1398
    %vm1400 = vweird.f32 %v1383
    %vm1401 = vweird.f32 %v1394
    %vm1402 = vmor %vm1400, %vm1401
    %v1403 = vsel %vm1402, %v1394, %v1399
    %v1404 = vmul.f32 %v1370, %v1393
    %v1405 = vmul.f32 %v1371, %v1403
    %v1406 = vperm.slane %v45, 0
    %v1407 = vmul.f32 %v1404, %v1406
    %v1408 = vmul.f32 %v1405, %v1406
    %v1409 = vperm.slane %v46, 0
    %v1410 = vadd.f32 %v1407, %v1409
    %v1411 = vadd.f32 %v1408, %v1409
    %1412 = vst.msk [vmem:[#allocation5] sm:$0xff] %vm105, %v1410
    %1413 = vst.msk [vmem:[#allocation5 + $0x8] sm:$0xff] %vm105, %v1411
    // Predicated region
    $region30: #{encoder_block.1} parent=1 // pred_check
      _
    $region31: #{encoder_block.1} parent=1 // pred_check_branch
      %1415 = sbr.rel (0) target = $region33
    $region32: #{encoder_block.1} parent=1 // pred_region
      %1417 = vsyncadd [#allocation4], 0
      %s1418 = sshll.u32 [#allocation5], 4
      %s1419 = int_to_ptr.vmem [resolvable:$true] %s1418
      %s1420 = sshll.u32 %s6, 4
      %s1421 = int_to_ptr.hbm [resolvable:$true] %s1420
      %1426 = dma.vmem_to_hbm [thread:$0]  %s1419, 256, %s1421, [#allocation4], 128, 128, 8
    $region33: #{encoder_block.1} parent=1 // pred_fallthru
      _
    // Predicated region
    $region34: #{encoder_block.1} parent=1 // pred_check
      _
    $region35: #{encoder_block.1} parent=1 // pred_check_branch
      %1428 = sbr.rel (0) target = $region37
    $region36: #{encoder_block.1} parent=1 // pred_region
      %1430 = dma.done [#allocation4], 256
    $region37: #{encoder_block.1} parent=1 // pred_fallthru
      _
    %1431 = vsyncpa [#allocation3], 1
    %1432 = vsyncpa [#allocation4], 1

</llo_original>
